<compile_context>
chip_gen: v5e
topology: v5e:2x2
jax: 0.10.0
libtpu: 0.0.40
codegen_flags: <defaults>
</compile_context>

<pallas_src>
import functools

import jax
import jax.numpy as jnp
from jax.experimental import pallas as pl
from jax.experimental.pallas import tpu as pltpu

LN_EPS = 1e-5  # torch.nn.LayerNorm default


def _vmem_limit_bytes():
    try:
        cap = int(pltpu.get_tpu_info().vmem_capacity_bytes)
    except Exception:
        cap = 64 * 1024 * 1024
    return min(cap * 3 // 4, 100 * 1024 * 1024)


def _round_up(x, m):
    return -(-x // m) * m


def _layernorm_f32(x, gamma, beta):
    """LayerNorm over the last axis in fp32 (matches CLIP's LayerNorm)."""
    xf = x.astype(jnp.float32)
    mu = jnp.mean(xf, axis=-1, keepdims=True)
    var = jnp.mean(jnp.square(xf - mu), axis=-1, keepdims=True)
    y = (xf - mu) * jax.lax.rsqrt(var + LN_EPS)
    return y * gamma.astype(jnp.float32) + beta.astype(jnp.float32)


# ---------------------------------------------------------------------------
# Kernel 1 (grid over batch): patch-embed matmul + (class/pos emb) + ln_pre.
# CLS embedding is pre-folded into pos_ref's CLS row, so the whole [s_pad, D]
# token block comes out of a single dense matmul + add.
# ---------------------------------------------------------------------------
def _embed_ln_pre_kernel(t_ref, w_ref, pos_ref, gb_ref, o_ref):
    emb = jnp.dot(t_ref[0], w_ref[...], preferred_element_type=jnp.float32)
    tok = emb + pos_ref[...].astype(jnp.float32)
    o_ref[0] = _layernorm_f32(tok, gb_ref[0:1, :], gb_ref[1:2, :]).astype(o_ref.dtype)


# ---------------------------------------------------------------------------
# Kernel 2 (grid=(B, L), L innermost "arbitrary"): the full transformer stack.
# Residual stream lives in an f32 VMEM scratch across all L layers; per-layer
# weights are streamed (double-buffered) along the l grid axis.
# ---------------------------------------------------------------------------
def _transformer_kernel(x_ref, vec_ref, wqkv_ref, bqkv_ref, wo_ref,
                        wfc_ref, bfc_ref, wpr_ref, o_ref, xres_ref,
                        *, n_head, s_real, mm_dtype):
    l = pl.program_id(1)

    @pl.when(l == 0)
    def _():  # load this batch element's tokens into the resident f32 stream
        xres_ref[...] = x_ref[0].astype(jnp.float32)

    x = xres_ref[...]                          # [S, D] f32 residual stream
    S, D = x.shape
    hd = D // n_head

    vecs = vec_ref[0]                          # [8, D] f32 packed vectors
    ln1g, ln1b = vecs[0:1, :], vecs[1:2, :]
    bo = vecs[2:3, :]
    ln2g, ln2b = vecs[3:4, :], vecs[4:5, :]
    bpr = vecs[5:6, :]

    # ---- multi-head self-attention on ln_1(x) ----
    xn = _layernorm_f32(x, ln1g, ln1b).astype(mm_dtype)
    qkv = jnp.dot(xn, wqkv_ref[0], preferred_element_type=jnp.float32) \
        + bqkv_ref[0].astype(jnp.float32)      # [S, 3D]; q scale pre-folded
    q = qkv[:, 0:D].astype(mm_dtype)
    k = qkv[:, D:2 * D].astype(mm_dtype)
    v = qkv[:, 2 * D:3 * D].astype(mm_dtype)

    if s_real < S:                             # additive mask for padded keys
        kidx = jax.lax.broadcasted_iota(jnp.int32, (1, S), 1)
        neg = jnp.where(kidx < s_real, 0.0, -1e30).astype(jnp.float32)
    else:
        neg = None

    ctx_heads = []
    for h in range(n_head):
        lo = h * hd
        sc = jax.lax.dot_general(q[:, lo:lo + hd], k[:, lo:lo + hd],
                                 (((1,), (1,)), ((), ())),
                                 preferred_element_type=jnp.float32)   # [S, S]
        if neg is not None:
            sc = sc + neg
        sc = sc - jnp.max(sc, axis=-1, keepdims=True)
        pr = jnp.exp(sc)
        pr = pr * pl.reciprocal(jnp.sum(pr, axis=-1, keepdims=True), approx=True)
        ctx_heads.append(jnp.dot(pr.astype(mm_dtype), v[:, lo:lo + hd],
                                 preferred_element_type=jnp.float32))
    ctx = jnp.concatenate(ctx_heads, axis=-1)  # [S, D] f32, registers only

    attn = jnp.dot(ctx.astype(mm_dtype), wo_ref[0],
                   preferred_element_type=jnp.float32) + bo
    x = x + attn

    # ---- MLP on ln_2(x): Linear -> QuickGELU -> Linear ----
    xn2 = _layernorm_f32(x, ln2g, ln2b).astype(mm_dtype)
    hmid = jnp.dot(xn2, wfc_ref[0], preferred_element_type=jnp.float32) \
        + bfc_ref[0].astype(jnp.float32)
    hmid = hmid * jax.nn.sigmoid(1.702 * hmid)           # QuickGELU (f32)
    mlp = jnp.dot(hmid.astype(mm_dtype), wpr_ref[0],
                  preferred_element_type=jnp.float32) + bpr
    x = x + mlp

    xres_ref[...] = x

    @pl.when(l == pl.num_programs(1) - 1)
    def _():
        o_ref[0] = x.astype(o_ref.dtype)


# ---------------------------------------------------------------------------
# Kernel 3 (grid over batch): ln_post + output projection over the full s_pad
# token block (dense, 0-offset); CLS + padding rows dropped in the wrapper.
# ---------------------------------------------------------------------------
def _ln_post_proj_kernel(x_ref, gb_ref, proj_ref, o_ref):
    xn = _layernorm_f32(x_ref[0], gb_ref[0:1, :], gb_ref[1:2, :])
    o_ref[0] = jnp.dot(xn.astype(proj_ref.dtype), proj_ref[...],
                       preferred_element_type=jnp.float32).astype(o_ref.dtype)


# ---------------------------------------------------------------------------
# Wrapper (layout glue only).
# ---------------------------------------------------------------------------
def _interp_linear(pos, out_len):
    """F.interpolate(..., mode='linear', align_corners=False) along tokens.
    Identity when lengths match (the default case here)."""
    in_len = pos.shape[0]
    if in_len == out_len:
        return pos
    scale = in_len / out_len
    src = (jnp.arange(out_len, dtype=jnp.float32) + 0.5) * scale - 0.5
    src = jnp.clip(src, 0.0, in_len - 1)
    lo = jnp.floor(src).astype(jnp.int32)
    hi = jnp.minimum(lo + 1, in_len - 1)
    w = (src - lo.astype(jnp.float32))[:, None]
    return pos[lo] * (1.0 - w) + pos[hi] * w


def vision_transformer_forward(x, params, *, patch_size, n_head, layers):
    mm_dtype = params['w_embed'].dtype          # bf16 by default
    B, C, H, W = x.shape
    p = patch_size
    hp, wp = H // p, W // p
    n_patches = hp * wp
    cpp = C * p * p
    cpp_pad, D = params['w_embed'].shape
    s_real = n_patches + 1
    s_pad = max(16, _round_up(s_real, 16))      # bf16 sublane-friendly padding

    # Patch extraction (== stride-p conv as matmul) + pad to (s_pad, cpp_pad).
    # Token layout: [patch tokens | CLS | padding]  -> patch rows are 0-offset.
    patches = x.reshape(B, C, hp, p, wp, p).transpose(0, 2, 4, 1, 3, 5)
    patches = patches.reshape(B, n_patches, cpp)
    tok_in = jnp.pad(patches.astype(mm_dtype),
                     ((0, 0), (0, s_pad - n_patches), (0, cpp_pad - cpp)))

    # Positional embedding (interpolated), reordered patch-first/CLS-last with
    # the class embedding folded into the CLS row; padded rows are zero.
    pos = _interp_linear(params['pos_emb'].astype(jnp.float32), s_real)
    cls_row = pos[0:1, :] + params['class_emb'].astype(jnp.float32)[None, :]
    pos_full = jnp.concatenate(
        [pos[1:], cls_row, jnp.zeros((s_pad - s_real, D), jnp.float32)], axis=0)

    vmem = _vmem_limit_bytes()
    cp1 = pltpu.CompilerParams(dimension_semantics=("parallel",),
                               vmem_limit_bytes=vmem)
    cp2 = pltpu.CompilerParams(dimension_semantics=("parallel", "arbitrary"),
                               vmem_limit_bytes=vmem)

    # --- fused patch-embed + cls + pos + ln_pre ---
    x_tok = pl.pallas_call(
        _embed_ln_pre_kernel,
        grid=(B,),
        out_shape=jax.ShapeDtypeStruct((B, s_pad, D), mm_dtype),
        in_specs=[
            pl.BlockSpec((1, s_pad, cpp_pad), lambda b: (b, 0, 0)),
            pl.BlockSpec((cpp_pad, D), lambda b: (0, 0)),   # resident weight
            pl.BlockSpec((s_pad, D), lambda b: (0, 0)),     # resident pos emb
            pl.BlockSpec((2, D), lambda b: (0, 0)),          # ln_pre gamma/beta
        ],
        out_specs=pl.BlockSpec((1, s_pad, D), lambda b: (b, 0, 0)),
        compiler_params=cp1,
    )(tok_in, params['w_embed'], pos_full, params['ln_pre_gb'])

    # --- all transformer blocks in one call: grid=(B, L), weights indexed by l
    x_tok = pl.pallas_call(
        functools.partial(_transformer_kernel, n_head=n_head, s_real=s_real,
                          mm_dtype=mm_dtype),
        grid=(B, layers),
        out_shape=jax.ShapeDtypeStruct((B, s_pad, D), mm_dtype),
        in_specs=[
            pl.BlockSpec((1, s_pad, D), lambda b, l: (b, 0, 0)),   # tokens (per b)
            pl.BlockSpec((1, 8, D), lambda b, l: (l, 0, 0)),       # packed ln/bias
            pl.BlockSpec((1, D, 3 * D), lambda b, l: (l, 0, 0)),   # wqkv (bf16)
            pl.BlockSpec((1, 1, 3 * D), lambda b, l: (l, 0, 0)),   # bqkv (f32)
            pl.BlockSpec((1, D, D), lambda b, l: (l, 0, 0)),       # wo   (bf16)
            pl.BlockSpec((1, D, 4 * D), lambda b, l: (l, 0, 0)),   # wfc  (bf16)
            pl.BlockSpec((1, 1, 4 * D), lambda b, l: (l, 0, 0)),   # bfc  (f32)
            pl.BlockSpec((1, 4 * D, D), lambda b, l: (l, 0, 0)),   # wpr  (bf16)
        ],
        out_specs=pl.BlockSpec((1, s_pad, D), lambda b, l: (b, 0, 0)),
        scratch_shapes=[pltpu.VMEM((s_pad, D), jnp.float32)],       # f32 residual
        compiler_params=cp2,
    )(x_tok, params['vecs'], params['wqkv'], params['bqkv'], params['wo'],
      params['wfc'], params['bfc'], params['wpr'])

    # --- ln_post + projection over all s_pad rows (dense stores) ---
    out_dim = params['proj'].shape[1]
    out_full = pl.pallas_call(
        _ln_post_proj_kernel,
        grid=(B,),
        out_shape=jax.ShapeDtypeStruct((B, s_pad, out_dim), x.dtype),
        in_specs=[
            pl.BlockSpec((1, s_pad, D), lambda b: (b, 0, 0)),
            pl.BlockSpec((2, D), lambda b: (0, 0)),
            pl.BlockSpec((D, out_dim), lambda b: (0, 0)),
        ],
        out_specs=pl.BlockSpec((1, s_pad, out_dim), lambda b: (b, 0, 0)),
        compiler_params=cp1,
    )(x_tok, params['ln_post_gb'], params['proj'])

    return out_full[:, :n_patches, :]           # drop CLS + padding rows


# ---------------------------------------------------------------------------
# Parameters. Matmul weights pre-transposed ([in, out]), stacked over layers,
# stored in mm_dtype (bf16 by default); the 1/sqrt(head_dim) q-scale is folded
# into wqkv / bqkv; LayerNorm params + small biases packed into [L, 8, D].
# ---------------------------------------------------------------------------
def init_params(key, *, input_resolution, patch_size, width, layers, heads,
                output_dim, mm_dtype=jnp.bfloat16, param_dtype=jnp.float32):
    D = width
    p = patch_size
    cpp = 3 * p * p
    cpp_pad = _round_up(cpp, 128)
    hd = D // heads
    qscale = float(hd) ** -0.5
    scale = D ** -0.5
    n_tok = (input_resolution // patch_size) ** 2 + 1
    keys = jax.random.split(key, 4 + layers)

    conv_w = 0.02 * jax.random.normal(keys[0], (D, 3, p, p), param_dtype)
    w_embed = jnp.zeros((cpp_pad, D), param_dtype)
    w_embed = w_embed.at[:cpp, :].set(conv_w.reshape(D, cpp).T)

    wqkv_l, bqkv_l, wo_l, wfc_l, bfc_l, wpr_l, vec_l = [], [], [], [], [], [], []
    for l in range(layers):
        k = jax.random.split(keys[4 + l], 6)
        wqkv = 0.02 * jax.random.normal(k[0], (D, 3 * D), param_dtype)
        bqkv = 0.01 * jax.random.normal(k[1], (3 * D,), param_dtype)
        wqkv = wqkv.at[:, :D].multiply(qscale)      # fold q scale
        bqkv = bqkv.at[:D].multiply(qscale)
        wo = 0.02 * jax.random.normal(k[2], (D, D), param_dtype)
        bo = jnp.zeros((D,), param_dtype)
        wfc = 0.02 * jax.random.normal(k[3], (D, 4 * D), param_dtype)
        bfc = 0.01 * jax.random.normal(k[4], (4 * D,), param_dtype)
        wpr = 0.02 * jax.random.normal(k[5], (4 * D, D), param_dtype)
        bpr = jnp.zeros((D,), param_dtype)
        ones = jnp.ones((D,), param_dtype)
        zeros = jnp.zeros((D,), param_dtype)
        vec = jnp.stack([ones, zeros, bo, ones, zeros, bpr, zeros, zeros], axis=0)

        wqkv_l.append(wqkv); bqkv_l.append(bqkv[None, :]); wo_l.append(wo)
        wfc_l.append(wfc); bfc_l.append(bfc[None, :]); wpr_l.append(wpr)
        vec_l.append(vec)

    return dict(
        w_embed=w_embed.astype(mm_dtype),                        # [cpp_pad, D]
        class_emb=scale * jax.random.normal(keys[1], (D,), param_dtype),
        pos_emb=scale * jax.random.normal(keys[2], (n_tok, D), param_dtype),
        ln_pre_gb=jnp.stack([jnp.ones((D,), param_dtype),
                             jnp.zeros((D,), param_dtype)], axis=0),
        ln_post_gb=jnp.stack([jnp.ones((D,), param_dtype),
                              jnp.zeros((D,), param_dtype)], axis=0),
        proj=(scale * jax.random.normal(keys[3], (D, output_dim),
                                        param_dtype)).astype(mm_dtype),
        wqkv=jnp.stack(wqkv_l).astype(mm_dtype),                 # [L, D, 3D]
        bqkv=jnp.stack(bqkv_l),                                  # [L, 1, 3D] f32
        wo=jnp.stack(wo_l).astype(mm_dtype),                     # [L, D, D]
        wfc=jnp.stack(wfc_l).astype(mm_dtype),                   # [L, D, 4D]
        bfc=jnp.stack(bfc_l),                                    # [L, 1, 4D] f32
        wpr=jnp.stack(wpr_l).astype(mm_dtype),                   # [L, 4D, D]
        vecs=jnp.stack(vec_l),                                   # [L, 8, D]  f32
    )


if __name__ == "__main__":
    input_resolution, patch_size = 16, 8
    width, layers, heads, output_dim = 32, 2, 4, 16
    batch = 2

    key = jax.random.PRNGKey(0)
    k_img, k_par = jax.random.split(key)
    x = jax.random.normal(k_img, (batch, 3, input_resolution, input_resolution),
                          jnp.float32)
    params = init_params(k_par, input_resolution=input_resolution,
                         patch_size=patch_size, width=width, layers=layers,
                         heads=heads, output_dim=output_dim)

    fwd = jax.jit(functools.partial(vision_transformer_forward,
                                    patch_size=patch_size, n_head=heads,
                                    layers=layers))
    out = fwd(x, params)
    jax.block_until_ready(out)

    expected = (batch, (input_resolution // patch_size) ** 2, output_dim)
    assert out.shape == expected, (out.shape, expected)
    assert bool(jnp.all(jnp.isfinite(out.astype(jnp.float32))))
    print("KERNEL_OK")
</pallas_src>

<mosaic_0001>
module attributes {stable_mosaic.version = 11 : i64} {
  func.func @_embed_ln_pre_kernel(%arg0: i32, %arg1: memref<1x16x256xbf16, #tpu.memory_space<vmem>>, %arg2: memref<256x32xbf16, #tpu.memory_space<vmem>>, %arg3: memref<16x32xf32, #tpu.memory_space<vmem>>, %arg4: memref<2x32xf32, #tpu.memory_space<vmem>>, %arg5: memref<1x16x32xbf16, #tpu.memory_space<vmem>>) attributes {dimension_semantics = [#tpu.dimension_semantics<parallel>], iteration_bounds = array<i64: 2>, scalar_prefetch = 0 : i64, scratch_operands = 0 : i64, tpu.core_type = #tpu.core_type<tc>, window_params = [{transform_indices = @transform_0, window_bounds = array<i64: 1, 16, 256>}, {pipeline_mode = #tpu.pipeline_mode<synchronous>, transform_indices = @transform_1, window_bounds = array<i64: 256, 32>}, {pipeline_mode = #tpu.pipeline_mode<synchronous>, transform_indices = @transform_2, window_bounds = array<i64: 16, 32>}, {pipeline_mode = #tpu.pipeline_mode<synchronous>, transform_indices = @transform_3, window_bounds = array<i64: 2, 32>}, {transform_indices = @transform_4, window_bounds = array<i64: 1, 16, 32>}]} {
    %c0 = arith.constant 0 : index
    %c0_0 = arith.constant 0 : index
    %c0_1 = arith.constant 0 : index
    %0 = vector.load %arg1[%c0, %c0_0, %c0_1] : memref<1x16x256xbf16, #tpu.memory_space<vmem>>, vector<1x16x256xbf16>
    %1 = vector.shape_cast %0 : vector<1x16x256xbf16> to vector<16x256xbf16>
    %c0_2 = arith.constant 0 : index
    %c0_3 = arith.constant 0 : index
    %2 = vector.load %arg2[%c0_2, %c0_3] : memref<256x32xbf16, #tpu.memory_space<vmem>>, vector<256x32xbf16>
    %cst = arith.constant dense<0.000000e+00> : vector<16x32xf32>
    %3 = tpu.matmul %1, %2, %cst {dimension_numbers = #tpu.dot_dimension_numbers<[1], [0], [0], [1], [0, 0, 1, 1], [], []>} : vector<16x256xbf16>, vector<256x32xbf16>, vector<16x32xf32> -> vector<16x32xf32>
    %c0_4 = arith.constant 0 : index
    %c0_5 = arith.constant 0 : index
    %4 = vector.load %arg3[%c0_4, %c0_5] : memref<16x32xf32, #tpu.memory_space<vmem>>, vector<16x32xf32>
    %5 = arith.addf %3, %4 : vector<16x32xf32>
    %c0_6 = arith.constant 0 : index
    %c0_7 = arith.constant 0 : index
    %6 = vector.load %arg4[%c0_6, %c0_7] : memref<2x32xf32, #tpu.memory_space<vmem>>, vector<1x32xf32>
    %c1 = arith.constant 1 : index
    %c0_8 = arith.constant 0 : index
    %7 = vector.load %arg4[%c1, %c0_8] : memref<2x32xf32, #tpu.memory_space<vmem>>, vector<1x32xf32>
    %cst_9 = arith.constant dense<0.000000e+00> : vector<16xf32>
    %8 = vector.multi_reduction <add>, %5, %cst_9 [1] : vector<16x32xf32> to vector<16xf32>
    %9 = vector.shape_cast %8 : vector<16xf32> to vector<16x1xf32>
    %cst_10 = arith.constant 3.200000e+01 : f32
    %10 = vector.broadcast %cst_10 : f32 to vector<16x1xf32>
    %11 = arith.divf %9, %10 : vector<16x1xf32>
    %12 = vector.broadcast %11 : vector<16x1xf32> to vector<16x32xf32>
    %13 = arith.subf %5, %12 : vector<16x32xf32>
    %14 = arith.mulf %13, %13 : vector<16x32xf32>
    %cst_11 = arith.constant dense<0.000000e+00> : vector<16xf32>
    %15 = vector.multi_reduction <add>, %14, %cst_11 [1] : vector<16x32xf32> to vector<16xf32>
    %16 = vector.shape_cast %15 : vector<16xf32> to vector<16x1xf32>
    %cst_12 = arith.constant 3.200000e+01 : f32
    %17 = vector.broadcast %cst_12 : f32 to vector<16x1xf32>
    %18 = arith.divf %16, %17 : vector<16x1xf32>
    %19 = vector.broadcast %11 : vector<16x1xf32> to vector<16x32xf32>
    %20 = arith.subf %5, %19 : vector<16x32xf32>
    %cst_13 = arith.constant 9.99999974E-6 : f32
    %21 = vector.broadcast %cst_13 : f32 to vector<16x1xf32>
    %22 = arith.addf %18, %21 : vector<16x1xf32>
    %23 = math.rsqrt %22 : vector<16x1xf32>
    %24 = vector.broadcast %23 : vector<16x1xf32> to vector<16x32xf32>
    %25 = arith.mulf %20, %24 : vector<16x32xf32>
    %26 = vector.broadcast %6 : vector<1x32xf32> to vector<16x32xf32>
    %27 = arith.mulf %25, %26 : vector<16x32xf32>
    %28 = vector.broadcast %7 : vector<1x32xf32> to vector<16x32xf32>
    %29 = arith.addf %27, %28 : vector<16x32xf32>
    %30 = arith.truncf %29 : vector<16x32xf32> to vector<16x32xbf16>
    %c0_14 = arith.constant 0 : index
    %c0_15 = arith.constant 0 : index
    %c0_16 = arith.constant 0 : index
    %31 = vector.load %arg5[%c0_14, %c0_15, %c0_16] : memref<1x16x32xbf16, #tpu.memory_space<vmem>>, vector<1x16x32xbf16>
    %32 = vector.shape_cast %31 : vector<1x16x32xbf16> to vector<16x32xbf16>
    %33 = vector.shape_cast %30 : vector<16x32xbf16> to vector<1x16x32xbf16>
    tpu.vector_store %arg5[%c0_14, %c0_15, %c0_16], %33 {strides = array<i32>} : memref<1x16x32xbf16, #tpu.memory_space<vmem>>, vector<1x16x32xbf16>,
    return
  }
  func.func @transform_0(%arg0: i32) -> (i32, i32, i32) {
    %c0_i32 = arith.constant 0 : i32
    %c0_i32_0 = arith.constant 0 : i32
    %c0_i32_1 = arith.constant 0 : i32
    return %arg0, %c0_i32, %c0_i32_0 : i32, i32, i32
  }
  func.func @transform_1(%arg0: i32) -> (i32, i32) {
    %c0_i32 = arith.constant 0 : i32
    %c0_i32_0 = arith.constant 0 : i32
    %c0_i32_1 = arith.constant 0 : i32
    return %c0_i32, %c0_i32_0 : i32, i32
  }
  func.func @transform_2(%arg0: i32) -> (i32, i32) {
    %c0_i32 = arith.constant 0 : i32
    %c0_i32_0 = arith.constant 0 : i32
    %c0_i32_1 = arith.constant 0 : i32
    return %c0_i32, %c0_i32_0 : i32, i32
  }
  func.func @transform_3(%arg0: i32) -> (i32, i32) {
    %c0_i32 = arith.constant 0 : i32
    %c0_i32_0 = arith.constant 0 : i32
    %c0_i32_1 = arith.constant 0 : i32
    return %c0_i32, %c0_i32_0 : i32, i32
  }
  func.func @transform_4(%arg0: i32) -> (i32, i32, i32) {
    %c0_i32 = arith.constant 0 : i32
    %c0_i32_0 = arith.constant 0 : i32
    %c0_i32_1 = arith.constant 0 : i32
    return %arg0, %c0_i32, %c0_i32_0 : i32, i32, i32
  }
}

module attributes {stable_mosaic.version = 11 : i64} {
  func.func @_transformer_kernel(%arg0: i32, %arg1: i32, %arg2: memref<1x16x32xbf16, #tpu.memory_space<vmem>>, %arg3: memref<1x8x32xf32, #tpu.memory_space<vmem>>, %arg4: memref<1x32x96xbf16, #tpu.memory_space<vmem>>, %arg5: memref<1x1x96xf32, #tpu.memory_space<vmem>>, %arg6: memref<1x32x32xbf16, #tpu.memory_space<vmem>>, %arg7: memref<1x32x128xbf16, #tpu.memory_space<vmem>>, %arg8: memref<1x1x128xf32, #tpu.memory_space<vmem>>, %arg9: memref<1x128x32xbf16, #tpu.memory_space<vmem>>, %arg10: memref<1x16x32xbf16, #tpu.memory_space<vmem>>, %arg11: memref<16x32xf32, #tpu.memory_space<vmem>>) attributes {dimension_semantics = [#tpu.dimension_semantics<parallel>, #tpu.dimension_semantics<arbitrary>], iteration_bounds = array<i64: 2, 2>, scalar_prefetch = 0 : i64, scratch_operands = 1 : i64, tpu.core_type = #tpu.core_type<tc>, window_params = [{transform_indices = @transform_0, window_bounds = array<i64: 1, 16, 32>}, {transform_indices = @transform_1, window_bounds = array<i64: 1, 8, 32>}, {transform_indices = @transform_2, window_bounds = array<i64: 1, 32, 96>}, {transform_indices = @transform_3, window_bounds = array<i64: 1, 1, 96>}, {transform_indices = @transform_4, window_bounds = array<i64: 1, 32, 32>}, {transform_indices = @transform_5, window_bounds = array<i64: 1, 32, 128>}, {transform_indices = @transform_6, window_bounds = array<i64: 1, 1, 128>}, {transform_indices = @transform_7, window_bounds = array<i64: 1, 128, 32>}, {transform_indices = @transform_8, window_bounds = array<i64: 1, 16, 32>}]} {
    %c0_i32 = arith.constant 0 : i32
    %0 = arith.cmpi eq, %arg1, %c0_i32 : i32
    %1 = arith.extui %0 : i1 to i32
    %c0_i32_0 = arith.constant 0 : i32
    %2 = arith.cmpi ne, %1, %c0_i32_0 : i32
    scf.if %2 {
      %c0_59 = arith.constant 0 : index
      %c0_60 = arith.constant 0 : index
      %c0_61 = arith.constant 0 : index
      %183 = vector.load %arg2[%c0_59, %c0_60, %c0_61] : memref<1x16x32xbf16, #tpu.memory_space<vmem>>, vector<1x16x32xbf16>
      %184 = vector.shape_cast %183 : vector<1x16x32xbf16> to vector<16x32xbf16>
      %185 = arith.extf %184 : vector<16x32xbf16> to vector<16x32xf32>
      %c0_62 = arith.constant 0 : index
      %c0_63 = arith.constant 0 : index
      %186 = vector.load %arg11[%c0_62, %c0_63] : memref<16x32xf32, #tpu.memory_space<vmem>>, vector<16x32xf32>
      tpu.vector_store %arg11[%c0_62, %c0_63], %185 {strides = array<i32>} : memref<16x32xf32, #tpu.memory_space<vmem>>, vector<16x32xf32>,
    } else {
    }
    %c0 = arith.constant 0 : index
    %c0_1 = arith.constant 0 : index
    %3 = vector.load %arg11[%c0, %c0_1] : memref<16x32xf32, #tpu.memory_space<vmem>>, vector<16x32xf32>
    %c0_2 = arith.constant 0 : index
    %c0_3 = arith.constant 0 : index
    %c0_4 = arith.constant 0 : index
    %4 = vector.load %arg3[%c0_2, %c0_3, %c0_4] : memref<1x8x32xf32, #tpu.memory_space<vmem>>, vector<1x8x32xf32>
    %5 = vector.shape_cast %4 : vector<1x8x32xf32> to vector<8x32xf32>
    %6 = vector.extract_strided_slice %5 {offsets = [0, 0], sizes = [1, 32], strides = [1, 1]} : vector<8x32xf32> to vector<1x32xf32>
    %7 = vector.extract_strided_slice %5 {offsets = [1, 0], sizes = [1, 32], strides = [1, 1]} : vector<8x32xf32> to vector<1x32xf32>
    %8 = vector.extract_strided_slice %5 {offsets = [2, 0], sizes = [1, 32], strides = [1, 1]} : vector<8x32xf32> to vector<1x32xf32>
    %9 = vector.extract_strided_slice %5 {offsets = [3, 0], sizes = [1, 32], strides = [1, 1]} : vector<8x32xf32> to vector<1x32xf32>
    %10 = vector.extract_strided_slice %5 {offsets = [4, 0], sizes = [1, 32], strides = [1, 1]} : vector<8x32xf32> to vector<1x32xf32>
    %11 = vector.extract_strided_slice %5 {offsets = [5, 0], sizes = [1, 32], strides = [1, 1]} : vector<8x32xf32> to vector<1x32xf32>
    %cst = arith.constant dense<0.000000e+00> : vector<16xf32>
    %12 = vector.multi_reduction <add>, %3, %cst [1] : vector<16x32xf32> to vector<16xf32>
    %13 = vector.shape_cast %12 : vector<16xf32> to vector<16x1xf32>
    %cst_5 = arith.constant 3.200000e+01 : f32
    %14 = vector.broadcast %cst_5 : f32 to vector<16x1xf32>
    %15 = arith.divf %13, %14 : vector<16x1xf32>
    %16 = vector.broadcast %15 : vector<16x1xf32> to vector<16x32xf32>
    %17 = arith.subf %3, %16 : vector<16x32xf32>
    %18 = arith.mulf %17, %17 : vector<16x32xf32>
    %cst_6 = arith.constant dense<0.000000e+00> : vector<16xf32>
    %19 = vector.multi_reduction <add>, %18, %cst_6 [1] : vector<16x32xf32> to vector<16xf32>
    %20 = vector.shape_cast %19 : vector<16xf32> to vector<16x1xf32>
    %cst_7 = arith.constant 3.200000e+01 : f32
    %21 = vector.broadcast %cst_7 : f32 to vector<16x1xf32>
    %22 = arith.divf %20, %21 : vector<16x1xf32>
    %23 = vector.broadcast %15 : vector<16x1xf32> to vector<16x32xf32>
    %24 = arith.subf %3, %23 : vector<16x32xf32>
    %cst_8 = arith.constant 9.99999974E-6 : f32
    %25 = vector.broadcast %cst_8 : f32 to vector<16x1xf32>
    %26 = arith.addf %22, %25 : vector<16x1xf32>
    %27 = math.rsqrt %26 : vector<16x1xf32>
    %28 = vector.broadcast %27 : vector<16x1xf32> to vector<16x32xf32>
    %29 = arith.mulf %24, %28 : vector<16x32xf32>
    %30 = vector.broadcast %6 : vector<1x32xf32> to vector<16x32xf32>
    %31 = arith.mulf %29, %30 : vector<16x32xf32>
    %32 = vector.broadcast %7 : vector<1x32xf32> to vector<16x32xf32>
    %33 = arith.addf %31, %32 : vector<16x32xf32>
    %34 = arith.truncf %33 : vector<16x32xf32> to vector<16x32xbf16>
    %c0_9 = arith.constant 0 : index
    %c0_10 = arith.constant 0 : index
    %c0_11 = arith.constant 0 : index
    %35 = vector.load %arg4[%c0_9, %c0_10, %c0_11] : memref<1x32x96xbf16, #tpu.memory_space<vmem>>, vector<1x32x96xbf16>
    %36 = vector.shape_cast %35 : vector<1x32x96xbf16> to vector<32x96xbf16>
    %cst_12 = arith.constant dense<0.000000e+00> : vector<16x96xf32>
    %37 = tpu.matmul %34, %36, %cst_12 {dimension_numbers = #tpu.dot_dimension_numbers<[1], [0], [0], [1], [0, 0, 1, 1], [], []>} : vector<16x32xbf16>, vector<32x96xbf16>, vector<16x96xf32> -> vector<16x96xf32>
    %c0_13 = arith.constant 0 : index
    %c0_14 = arith.constant 0 : index
    %c0_15 = arith.constant 0 : index
    %38 = vector.load %arg5[%c0_13, %c0_14, %c0_15] : memref<1x1x96xf32, #tpu.memory_space<vmem>>, vector<1x1x96xf32>
    %39 = vector.shape_cast %38 : vector<1x1x96xf32> to vector<1x96xf32>
    %40 = vector.broadcast %39 : vector<1x96xf32> to vector<16x96xf32>
    %41 = arith.addf %37, %40 : vector<16x96xf32>
    %42 = vector.extract_strided_slice %41 {offsets = [0, 0], sizes = [16, 32], strides = [1, 1]} : vector<16x96xf32> to vector<16x32xf32>
    %43 = arith.truncf %42 : vector<16x32xf32> to vector<16x32xbf16>
    %44 = vector.extract_strided_slice %41 {offsets = [0, 32], sizes = [16, 32], strides = [1, 1]} : vector<16x96xf32> to vector<16x32xf32>
    %45 = arith.truncf %44 : vector<16x32xf32> to vector<16x32xbf16>
    %46 = vector.extract_strided_slice %41 {offsets = [0, 64], sizes = [16, 32], strides = [1, 1]} : vector<16x96xf32> to vector<16x32xf32>
    %47 = arith.truncf %46 : vector<16x32xf32> to vector<16x32xbf16>
    %48 = tpu.iota {dimensions = array<i32: 1>} : vector<1x16xi32>
    %c5_i32 = arith.constant 5 : i32
    %49 = vector.broadcast %c5_i32 : i32 to vector<1x16xi32>
    %50 = arith.cmpi slt, %48, %49 : vector<1x16xi32>
    %cst_16 = arith.constant 0.000000e+00 : f32
    %cst_17 = arith.constant -1.000000e+30 : f32
    %51 = vector.broadcast %cst_16 : f32 to vector<1x16xf32>
    %52 = vector.broadcast %cst_17 : f32 to vector<1x16xf32>
    %53 = arith.select %50, %51, %52 : vector<1x16xi1>, vector<1x16xf32>
    %54 = vector.extract_strided_slice %43 {offsets = [0, 0], sizes = [16, 8], strides = [1, 1]} : vector<16x32xbf16> to vector<16x8xbf16>
    %55 = vector.extract_strided_slice %45 {offsets = [0, 0], sizes = [16, 8], strides = [1, 1]} : vector<16x32xbf16> to vector<16x8xbf16>
    %cst_18 = arith.constant dense<0.000000e+00> : vector<16x16xf32>
    %56 = tpu.matmul %54, %55, %cst_18 {dimension_numbers = #tpu.dot_dimension_numbers<[1], [1], [0], [0], [0, 0, 1, 0], [], []>} : vector<16x8xbf16>, vector<16x8xbf16>, vector<16x16xf32> -> vector<16x16xf32>
    %57 = vector.broadcast %53 : vector<1x16xf32> to vector<16x16xf32>
    %58 = arith.addf %56, %57 : vector<16x16xf32>
    %cst_19 = arith.constant dense<0xFF800000> : vector<16xf32>
    %59 = vector.multi_reduction <maximumf>, %58, %cst_19 [1] : vector<16x16xf32> to vector<16xf32>
    %60 = vector.shape_cast %59 : vector<16xf32> to vector<16x1xf32>
    %61 = vector.broadcast %60 : vector<16x1xf32> to vector<16x16xf32>
    %62 = arith.subf %58, %61 : vector<16x16xf32>
    %63 = math.exp %62 : vector<16x16xf32>
    %cst_20 = arith.constant dense<0.000000e+00> : vector<16xf32>
    %64 = vector.multi_reduction <add>, %63, %cst_20 [1] : vector<16x16xf32> to vector<16xf32>
    %65 = vector.shape_cast %64 : vector<16xf32> to vector<16x1xf32>
    %66 = tpu.reciprocal %65 {approx = true} : vector<16x1xf32> -> vector<16x1xf32>
    %67 = vector.broadcast %66 : vector<16x1xf32> to vector<16x16xf32>
    %68 = arith.mulf %63, %67 : vector<16x16xf32>
    %69 = arith.truncf %68 : vector<16x16xf32> to vector<16x16xbf16>
    %70 = vector.extract_strided_slice %47 {offsets = [0, 0], sizes = [16, 8], strides = [1, 1]} : vector<16x32xbf16> to vector<16x8xbf16>
    %cst_21 = arith.constant dense<0.000000e+00> : vector<16x8xf32>
    %71 = tpu.matmul %69, %70, %cst_21 {dimension_numbers = #tpu.dot_dimension_numbers<[1], [0], [0], [1], [0, 0, 1, 1], [], []>} : vector<16x16xbf16>, vector<16x8xbf16>, vector<16x8xf32> -> vector<16x8xf32>
    %72 = vector.extract_strided_slice %43 {offsets = [0, 8], sizes = [16, 8], strides = [1, 1]} : vector<16x32xbf16> to vector<16x8xbf16>
    %73 = vector.extract_strided_slice %45 {offsets = [0, 8], sizes = [16, 8], strides = [1, 1]} : vector<16x32xbf16> to vector<16x8xbf16>
    %cst_22 = arith.constant dense<0.000000e+00> : vector<16x16xf32>
    %74 = tpu.matmul %72, %73, %cst_22 {dimension_numbers = #tpu.dot_dimension_numbers<[1], [1], [0], [0], [0, 0, 1, 0], [], []>} : vector<16x8xbf16>, vector<16x8xbf16>, vector<16x16xf32> -> vector<16x16xf32>
    %75 = vector.broadcast %53 : vector<1x16xf32> to vector<16x16xf32>
    %76 = arith.addf %74, %75 : vector<16x16xf32>
    %cst_23 = arith.constant dense<0xFF800000> : vector<16xf32>
    %77 = vector.multi_reduction <maximumf>, %76, %cst_23 [1] : vector<16x16xf32> to vector<16xf32>
    %78 = vector.shape_cast %77 : vector<16xf32> to vector<16x1xf32>
    %79 = vector.broadcast %78 : vector<16x1xf32> to vector<16x16xf32>
    %80 = arith.subf %76, %79 : vector<16x16xf32>
    %81 = math.exp %80 : vector<16x16xf32>
    %cst_24 = arith.constant dense<0.000000e+00> : vector<16xf32>
    %82 = vector.multi_reduction <add>, %81, %cst_24 [1] : vector<16x16xf32> to vector<16xf32>
    %83 = vector.shape_cast %82 : vector<16xf32> to vector<16x1xf32>
    %84 = tpu.reciprocal %83 {approx = true} : vector<16x1xf32> -> vector<16x1xf32>
    %85 = vector.broadcast %84 : vector<16x1xf32> to vector<16x16xf32>
    %86 = arith.mulf %81, %85 : vector<16x16xf32>
    %87 = arith.truncf %86 : vector<16x16xf32> to vector<16x16xbf16>
    %88 = vector.extract_strided_slice %47 {offsets = [0, 8], sizes = [16, 8], strides = [1, 1]} : vector<16x32xbf16> to vector<16x8xbf16>
    %cst_25 = arith.constant dense<0.000000e+00> : vector<16x8xf32>
    %89 = tpu.matmul %87, %88, %cst_25 {dimension_numbers = #tpu.dot_dimension_numbers<[1], [0], [0], [1], [0, 0, 1, 1], [], []>} : vector<16x16xbf16>, vector<16x8xbf16>, vector<16x8xf32> -> vector<16x8xf32>
    %90 = vector.extract_strided_slice %43 {offsets = [0, 16], sizes = [16, 8], strides = [1, 1]} : vector<16x32xbf16> to vector<16x8xbf16>
    %91 = vector.extract_strided_slice %45 {offsets = [0, 16], sizes = [16, 8], strides = [1, 1]} : vector<16x32xbf16> to vector<16x8xbf16>
    %cst_26 = arith.constant dense<0.000000e+00> : vector<16x16xf32>
    %92 = tpu.matmul %90, %91, %cst_26 {dimension_numbers = #tpu.dot_dimension_numbers<[1], [1], [0], [0], [0, 0, 1, 0], [], []>} : vector<16x8xbf16>, vector<16x8xbf16>, vector<16x16xf32> -> vector<16x16xf32>
    %93 = vector.broadcast %53 : vector<1x16xf32> to vector<16x16xf32>
    %94 = arith.addf %92, %93 : vector<16x16xf32>
    %cst_27 = arith.constant dense<0xFF800000> : vector<16xf32>
    %95 = vector.multi_reduction <maximumf>, %94, %cst_27 [1] : vector<16x16xf32> to vector<16xf32>
    %96 = vector.shape_cast %95 : vector<16xf32> to vector<16x1xf32>
    %97 = vector.broadcast %96 : vector<16x1xf32> to vector<16x16xf32>
    %98 = arith.subf %94, %97 : vector<16x16xf32>
    %99 = math.exp %98 : vector<16x16xf32>
    %cst_28 = arith.constant dense<0.000000e+00> : vector<16xf32>
    %100 = vector.multi_reduction <add>, %99, %cst_28 [1] : vector<16x16xf32> to vector<16xf32>
    %101 = vector.shape_cast %100 : vector<16xf32> to vector<16x1xf32>
    %102 = tpu.reciprocal %101 {approx = true} : vector<16x1xf32> -> vector<16x1xf32>
    %103 = vector.broadcast %102 : vector<16x1xf32> to vector<16x16xf32>
    %104 = arith.mulf %99, %103 : vector<16x16xf32>
    %105 = arith.truncf %104 : vector<16x16xf32> to vector<16x16xbf16>
    %106 = vector.extract_strided_slice %47 {offsets = [0, 16], sizes = [16, 8], strides = [1, 1]} : vector<16x32xbf16> to vector<16x8xbf16>
    %cst_29 = arith.constant dense<0.000000e+00> : vector<16x8xf32>
    %107 = tpu.matmul %105, %106, %cst_29 {dimension_numbers = #tpu.dot_dimension_numbers<[1], [0], [0], [1], [0, 0, 1, 1], [], []>} : vector<16x16xbf16>, vector<16x8xbf16>, vector<16x8xf32> -> vector<16x8xf32>
    %108 = vector.extract_strided_slice %43 {offsets = [0, 24], sizes = [16, 8], strides = [1, 1]} : vector<16x32xbf16> to vector<16x8xbf16>
    %109 = vector.extract_strided_slice %45 {offsets = [0, 24], sizes = [16, 8], strides = [1, 1]} : vector<16x32xbf16> to vector<16x8xbf16>
    %cst_30 = arith.constant dense<0.000000e+00> : vector<16x16xf32>
    %110 = tpu.matmul %108, %109, %cst_30 {dimension_numbers = #tpu.dot_dimension_numbers<[1], [1], [0], [0], [0, 0, 1, 0], [], []>} : vector<16x8xbf16>, vector<16x8xbf16>, vector<16x16xf32> -> vector<16x16xf32>
    %111 = vector.broadcast %53 : vector<1x16xf32> to vector<16x16xf32>
    %112 = arith.addf %110, %111 : vector<16x16xf32>
    %cst_31 = arith.constant dense<0xFF800000> : vector<16xf32>
    %113 = vector.multi_reduction <maximumf>, %112, %cst_31 [1] : vector<16x16xf32> to vector<16xf32>
    %114 = vector.shape_cast %113 : vector<16xf32> to vector<16x1xf32>
    %115 = vector.broadcast %114 : vector<16x1xf32> to vector<16x16xf32>
    %116 = arith.subf %112, %115 : vector<16x16xf32>
    %117 = math.exp %116 : vector<16x16xf32>
    %cst_32 = arith.constant dense<0.000000e+00> : vector<16xf32>
    %118 = vector.multi_reduction <add>, %117, %cst_32 [1] : vector<16x16xf32> to vector<16xf32>
    %119 = vector.shape_cast %118 : vector<16xf32> to vector<16x1xf32>
    %120 = tpu.reciprocal %119 {approx = true} : vector<16x1xf32> -> vector<16x1xf32>
    %121 = vector.broadcast %120 : vector<16x1xf32> to vector<16x16xf32>
    %122 = arith.mulf %117, %121 : vector<16x16xf32>
    %123 = arith.truncf %122 : vector<16x16xf32> to vector<16x16xbf16>
    %124 = vector.extract_strided_slice %47 {offsets = [0, 24], sizes = [16, 8], strides = [1, 1]} : vector<16x32xbf16> to vector<16x8xbf16>
    %cst_33 = arith.constant dense<0.000000e+00> : vector<16x8xf32>
    %125 = tpu.matmul %123, %124, %cst_33 {dimension_numbers = #tpu.dot_dimension_numbers<[1], [0], [0], [1], [0, 0, 1, 1], [], []>} : vector<16x16xbf16>, vector<16x8xbf16>, vector<16x8xf32> -> vector<16x8xf32>
    %126 = tpu.concatenate %71, %89, %107, %125 in 1 : vector<16x8xf32>, vector<16x8xf32>, vector<16x8xf32>, vector<16x8xf32> -> vector<16x32xf32>
    %127 = arith.truncf %126 : vector<16x32xf32> to vector<16x32xbf16>
    %c0_34 = arith.constant 0 : index
    %c0_35 = arith.constant 0 : index
    %c0_36 = arith.constant 0 : index
    %128 = vector.load %arg6[%c0_34, %c0_35, %c0_36] : memref<1x32x32xbf16, #tpu.memory_space<vmem>>, vector<1x32x32xbf16>
    %129 = vector.shape_cast %128 : vector<1x32x32xbf16> to vector<32x32xbf16>
    %cst_37 = arith.constant dense<0.000000e+00> : vector<16x32xf32>
    %130 = tpu.matmul %127, %129, %cst_37 {dimension_numbers = #tpu.dot_dimension_numbers<[1], [0], [0], [1], [0, 0, 1, 1], [], []>} : vector<16x32xbf16>, vector<32x32xbf16>, vector<16x32xf32> -> vector<16x32xf32>
    %131 = vector.broadcast %8 : vector<1x32xf32> to vector<16x32xf32>
    %132 = arith.addf %130, %131 : vector<16x32xf32>
    %133 = arith.addf %3, %132 : vector<16x32xf32>
    %cst_38 = arith.constant dense<0.000000e+00> : vector<16xf32>
    %134 = vector.multi_reduction <add>, %133, %cst_38 [1] : vector<16x32xf32> to vector<16xf32>
    %135 = vector.shape_cast %134 : vector<16xf32> to vector<16x1xf32>
    %cst_39 = arith.constant 3.200000e+01 : f32
    %136 = vector.broadcast %cst_39 : f32 to vector<16x1xf32>
    %137 = arith.divf %135, %136 : vector<16x1xf32>
    %138 = vector.broadcast %137 : vector<16x1xf32> to vector<16x32xf32>
    %139 = arith.subf %133, %138 : vector<16x32xf32>
    %140 = arith.mulf %139, %139 : vector<16x32xf32>
    %cst_40 = arith.constant dense<0.000000e+00> : vector<16xf32>
    %141 = vector.multi_reduction <add>, %140, %cst_40 [1] : vector<16x32xf32> to vector<16xf32>
    %142 = vector.shape_cast %141 : vector<16xf32> to vector<16x1xf32>
    %cst_41 = arith.constant 3.200000e+01 : f32
    %143 = vector.broadcast %cst_41 : f32 to vector<16x1xf32>
    %144 = arith.divf %142, %143 : vector<16x1xf32>
    %145 = vector.broadcast %137 : vector<16x1xf32> to vector<16x32xf32>
    %146 = arith.subf %133, %145 : vector<16x32xf32>
    %cst_42 = arith.constant 9.99999974E-6 : f32
    %147 = vector.broadcast %cst_42 : f32 to vector<16x1xf32>
    %148 = arith.addf %144, %147 : vector<16x1xf32>
    %149 = math.rsqrt %148 : vector<16x1xf32>
    %150 = vector.broadcast %149 : vector<16x1xf32> to vector<16x32xf32>
    %151 = arith.mulf %146, %150 : vector<16x32xf32>
    %152 = vector.broadcast %9 : vector<1x32xf32> to vector<16x32xf32>
    %153 = arith.mulf %151, %152 : vector<16x32xf32>
    %154 = vector.broadcast %10 : vector<1x32xf32> to vector<16x32xf32>
    %155 = arith.addf %153, %154 : vector<16x32xf32>
    %156 = arith.truncf %155 : vector<16x32xf32> to vector<16x32xbf16>
    %c0_43 = arith.constant 0 : index
    %c0_44 = arith.constant 0 : index
    %c0_45 = arith.constant 0 : index
    %157 = vector.load %arg7[%c0_43, %c0_44, %c0_45] : memref<1x32x128xbf16, #tpu.memory_space<vmem>>, vector<1x32x128xbf16>
    %158 = vector.shape_cast %157 : vector<1x32x128xbf16> to vector<32x128xbf16>
    %cst_46 = arith.constant dense<0.000000e+00> : vector<16x128xf32>
    %159 = tpu.matmul %156, %158, %cst_46 {dimension_numbers = #tpu.dot_dimension_numbers<[1], [0], [0], [1], [0, 0, 1, 1], [], []>} : vector<16x32xbf16>, vector<32x128xbf16>, vector<16x128xf32> -> vector<16x128xf32>
    %c0_47 = arith.constant 0 : index
    %c0_48 = arith.constant 0 : index
    %c0_49 = arith.constant 0 : index
    %160 = vector.load %arg8[%c0_47, %c0_48, %c0_49] : memref<1x1x128xf32, #tpu.memory_space<vmem>>, vector<1x1x128xf32>
    %161 = vector.shape_cast %160 : vector<1x1x128xf32> to vector<1x128xf32>
    %162 = vector.broadcast %161 : vector<1x128xf32> to vector<16x128xf32>
    %163 = arith.addf %159, %162 : vector<16x128xf32>
    %cst_50 = arith.constant 1.702000e+00 : f32
    %164 = vector.broadcast %cst_50 : f32 to vector<16x128xf32>
    %165 = arith.mulf %164, %163 : vector<16x128xf32>
    %166 = arith.negf %165 : vector<16x128xf32>
    %167 = math.exp %166 : vector<16x128xf32>
    %cst_51 = arith.constant 1.000000e+00 : f32
    %168 = vector.broadcast %cst_51 : f32 to vector<16x128xf32>
    %169 = arith.addf %168, %167 : vector<16x128xf32>
    %170 = arith.divf %168, %169 : vector<16x128xf32>
    %171 = arith.mulf %163, %170 : vector<16x128xf32>
    %172 = arith.truncf %171 : vector<16x128xf32> to vector<16x128xbf16>
    %c0_52 = arith.constant 0 : index
    %c0_53 = arith.constant 0 : index
    %c0_54 = arith.constant 0 : index
    %173 = vector.load %arg9[%c0_52, %c0_53, %c0_54] : memref<1x128x32xbf16, #tpu.memory_space<vmem>>, vector<1x128x32xbf16>
    %174 = vector.shape_cast %173 : vector<1x128x32xbf16> to vector<128x32xbf16>
    %cst_55 = arith.constant dense<0.000000e+00> : vector<16x32xf32>
    %175 = tpu.matmul %172, %174, %cst_55 {dimension_numbers = #tpu.dot_dimension_numbers<[1], [0], [0], [1], [0, 0, 1, 1], [], []>} : vector<16x128xbf16>, vector<128x32xbf16>, vector<16x32xf32> -> vector<16x32xf32>
    %176 = vector.broadcast %11 : vector<1x32xf32> to vector<16x32xf32>
    %177 = arith.addf %175, %176 : vector<16x32xf32>
    %178 = arith.addf %133, %177 : vector<16x32xf32>
    %c0_56 = arith.constant 0 : index
    %c0_57 = arith.constant 0 : index
    %179 = vector.load %arg11[%c0_56, %c0_57] : memref<16x32xf32, #tpu.memory_space<vmem>>, vector<16x32xf32>
    tpu.vector_store %arg11[%c0_56, %c0_57], %178 {strides = array<i32>} : memref<16x32xf32, #tpu.memory_space<vmem>>, vector<16x32xf32>,
    %c1_i32 = arith.constant 1 : i32
    %180 = arith.cmpi eq, %arg1, %c1_i32 : i32
    %181 = arith.extui %180 : i1 to i32
    %c0_i32_58 = arith.constant 0 : i32
    %182 = arith.cmpi ne, %181, %c0_i32_58 : i32
    scf.if %182 {
      %183 = arith.truncf %178 : vector<16x32xf32> to vector<16x32xbf16>
      %c0_59 = arith.constant 0 : index
      %c0_60 = arith.constant 0 : index
      %c0_61 = arith.constant 0 : index
      %184 = vector.load %arg10[%c0_59, %c0_60, %c0_61] : memref<1x16x32xbf16, #tpu.memory_space<vmem>>, vector<1x16x32xbf16>
      %185 = vector.shape_cast %184 : vector<1x16x32xbf16> to vector<16x32xbf16>
      %186 = vector.shape_cast %183 : vector<16x32xbf16> to vector<1x16x32xbf16>
      tpu.vector_store %arg10[%c0_59, %c0_60, %c0_61], %186 {strides = array<i32>} : memref<1x16x32xbf16, #tpu.memory_space<vmem>>, vector<1x16x32xbf16>,
    } else {
    }
    return
  }
  func.func @transform_0(%arg0: i32, %arg1: i32) -> (i32, i32, i32) {
    %c0_i32 = arith.constant 0 : i32
    %c0_i32_0 = arith.constant 0 : i32
    %c0_i32_1 = arith.constant 0 : i32
    return %arg0, %c0_i32, %c0_i32_0 : i32, i32, i32
  }
  func.func @transform_1(%arg0: i32, %arg1: i32) -> (i32, i32, i32) {
    %c0_i32 = arith.constant 0 : i32
    %c0_i32_0 = arith.constant 0 : i32
    %c0_i32_1 = arith.constant 0 : i32
    return %arg1, %c0_i32, %c0_i32_0 : i32, i32, i32
  }
  func.func @transform_2(%arg0: i32, %arg1: i32) -> (i32, i32, i32) {
    %c0_i32 = arith.constant 0 : i32
    %c0_i32_0 = arith.constant 0 : i32
    %c0_i32_1 = arith.constant 0 : i32
    return %arg1, %c0_i32, %c0_i32_0 : i32, i32, i32
  }
  func.func @transform_3(%arg0: i32, %arg1: i32) -> (i32, i32, i32) {
    %c0_i32 = arith.constant 0 : i32
    %c0_i32_0 = arith.constant 0 : i32
    %c0_i32_1 = arith.constant 0 : i32
    return %arg1, %c0_i32, %c0_i32_0 : i32, i32, i32
  }
  func.func @transform_4(%arg0: i32, %arg1: i32) -> (i32, i32, i32) {
    %c0_i32 = arith.constant 0 : i32
    %c0_i32_0 = arith.constant 0 : i32
    %c0_i32_1 = arith.constant 0 : i32
    return %arg1, %c0_i32, %c0_i32_0 : i32, i32, i32
  }
  func.func @transform_5(%arg0: i32, %arg1: i32) -> (i32, i32, i32) {
    %c0_i32 = arith.constant 0 : i32
    %c0_i32_0 = arith.constant 0 : i32
    %c0_i32_1 = arith.constant 0 : i32
    return %arg1, %c0_i32, %c0_i32_0 : i32, i32, i32
  }
  func.func @transform_6(%arg0: i32, %arg1: i32) -> (i32, i32, i32) {
    %c0_i32 = arith.constant 0 : i32
    %c0_i32_0 = arith.constant 0 : i32
    %c0_i32_1 = arith.constant 0 : i32
    return %arg1, %c0_i32, %c0_i32_0 : i32, i32, i32
  }
  func.func @transform_7(%arg0: i32, %arg1: i32) -> (i32, i32, i32) {
    %c0_i32 = arith.constant 0 : i32
    %c0_i32_0 = arith.constant 0 : i32
    %c0_i32_1 = arith.constant 0 : i32
    return %arg1, %c0_i32, %c0_i32_0 : i32, i32, i32
  }
  func.func @transform_8(%arg0: i32, %arg1: i32) -> (i32, i32, i32) {
    %c0_i32 = arith.constant 0 : i32
    %c0_i32_0 = arith.constant 0 : i32
    %c0_i32_1 = arith.constant 0 : i32
    return %arg0, %c0_i32, %c0_i32_0 : i32, i32, i32
  }
}

module attributes {stable_mosaic.version = 11 : i64} {
  func.func @_ln_post_proj_kernel(%arg0: i32, %arg1: memref<1x16x32xbf16, #tpu.memory_space<vmem>>, %arg2: memref<2x32xf32, #tpu.memory_space<vmem>>, %arg3: memref<32x16xbf16, #tpu.memory_space<vmem>>, %arg4: memref<1x16x16xf32, #tpu.memory_space<vmem>>) attributes {dimension_semantics = [#tpu.dimension_semantics<parallel>], iteration_bounds = array<i64: 2>, scalar_prefetch = 0 : i64, scratch_operands = 0 : i64, tpu.core_type = #tpu.core_type<tc>, window_params = [{transform_indices = @transform_0, window_bounds = array<i64: 1, 16, 32>}, {pipeline_mode = #tpu.pipeline_mode<synchronous>, transform_indices = @transform_1, window_bounds = array<i64: 2, 32>}, {pipeline_mode = #tpu.pipeline_mode<synchronous>, transform_indices = @transform_2, window_bounds = array<i64: 32, 16>}, {transform_indices = @transform_3, window_bounds = array<i64: 1, 16, 16>}]} {
    %c0 = arith.constant 0 : index
    %c0_0 = arith.constant 0 : index
    %c0_1 = arith.constant 0 : index
    %0 = vector.load %arg1[%c0, %c0_0, %c0_1] : memref<1x16x32xbf16, #tpu.memory_space<vmem>>, vector<1x16x32xbf16>
    %1 = vector.shape_cast %0 : vector<1x16x32xbf16> to vector<16x32xbf16>
    %c0_2 = arith.constant 0 : index
    %c0_3 = arith.constant 0 : index
    %2 = vector.load %arg2[%c0_2, %c0_3] : memref<2x32xf32, #tpu.memory_space<vmem>>, vector<1x32xf32>
    %c1 = arith.constant 1 : index
    %c0_4 = arith.constant 0 : index
    %3 = vector.load %arg2[%c1, %c0_4] : memref<2x32xf32, #tpu.memory_space<vmem>>, vector<1x32xf32>
    %4 = arith.extf %1 : vector<16x32xbf16> to vector<16x32xf32>
    %cst = arith.constant dense<0.000000e+00> : vector<16xf32>
    %5 = vector.multi_reduction <add>, %4, %cst [1] : vector<16x32xf32> to vector<16xf32>
    %6 = vector.shape_cast %5 : vector<16xf32> to vector<16x1xf32>
    %cst_5 = arith.constant 3.200000e+01 : f32
    %7 = vector.broadcast %cst_5 : f32 to vector<16x1xf32>
    %8 = arith.divf %6, %7 : vector<16x1xf32>
    %9 = vector.broadcast %8 : vector<16x1xf32> to vector<16x32xf32>
    %10 = arith.subf %4, %9 : vector<16x32xf32>
    %11 = arith.mulf %10, %10 : vector<16x32xf32>
    %cst_6 = arith.constant dense<0.000000e+00> : vector<16xf32>
    %12 = vector.multi_reduction <add>, %11, %cst_6 [1] : vector<16x32xf32> to vector<16xf32>
    %13 = vector.shape_cast %12 : vector<16xf32> to vector<16x1xf32>
    %cst_7 = arith.constant 3.200000e+01 : f32
    %14 = vector.broadcast %cst_7 : f32 to vector<16x1xf32>
    %15 = arith.divf %13, %14 : vector<16x1xf32>
    %16 = vector.broadcast %8 : vector<16x1xf32> to vector<16x32xf32>
    %17 = arith.subf %4, %16 : vector<16x32xf32>
    %cst_8 = arith.constant 9.99999974E-6 : f32
    %18 = vector.broadcast %cst_8 : f32 to vector<16x1xf32>
    %19 = arith.addf %15, %18 : vector<16x1xf32>
    %20 = math.rsqrt %19 : vector<16x1xf32>
    %21 = vector.broadcast %20 : vector<16x1xf32> to vector<16x32xf32>
    %22 = arith.mulf %17, %21 : vector<16x32xf32>
    %23 = vector.broadcast %2 : vector<1x32xf32> to vector<16x32xf32>
    %24 = arith.mulf %22, %23 : vector<16x32xf32>
    %25 = vector.broadcast %3 : vector<1x32xf32> to vector<16x32xf32>
    %26 = arith.addf %24, %25 : vector<16x32xf32>
    %27 = arith.truncf %26 : vector<16x32xf32> to vector<16x32xbf16>
    %c0_9 = arith.constant 0 : index
    %c0_10 = arith.constant 0 : index
    %28 = vector.load %arg3[%c0_9, %c0_10] : memref<32x16xbf16, #tpu.memory_space<vmem>>, vector<32x16xbf16>
    %cst_11 = arith.constant dense<0.000000e+00> : vector<16x16xf32>
    %29 = tpu.matmul %27, %28, %cst_11 {dimension_numbers = #tpu.dot_dimension_numbers<[1], [0], [0], [1], [0, 0, 1, 1], [], []>} : vector<16x32xbf16>, vector<32x16xbf16>, vector<16x16xf32> -> vector<16x16xf32>
    %c0_12 = arith.constant 0 : index
    %c0_13 = arith.constant 0 : index
    %c0_14 = arith.constant 0 : index
    %30 = vector.load %arg4[%c0_12, %c0_13, %c0_14] : memref<1x16x16xf32, #tpu.memory_space<vmem>>, vector<1x16x16xf32>
    %31 = vector.shape_cast %30 : vector<1x16x16xf32> to vector<16x16xf32>
    %32 = vector.shape_cast %29 : vector<16x16xf32> to vector<1x16x16xf32>
    tpu.vector_store %arg4[%c0_12, %c0_13, %c0_14], %32 {strides = array<i32>} : memref<1x16x16xf32, #tpu.memory_space<vmem>>, vector<1x16x16xf32>,
    return
  }
  func.func @transform_0(%arg0: i32) -> (i32, i32, i32) {
    %c0_i32 = arith.constant 0 : i32
    %c0_i32_0 = arith.constant 0 : i32
    %c0_i32_1 = arith.constant 0 : i32
    return %arg0, %c0_i32, %c0_i32_0 : i32, i32, i32
  }
  func.func @transform_1(%arg0: i32) -> (i32, i32) {
    %c0_i32 = arith.constant 0 : i32
    %c0_i32_0 = arith.constant 0 : i32
    %c0_i32_1 = arith.constant 0 : i32
    return %c0_i32, %c0_i32_0 : i32, i32
  }
  func.func @transform_2(%arg0: i32) -> (i32, i32) {
    %c0_i32 = arith.constant 0 : i32
    %c0_i32_0 = arith.constant 0 : i32
    %c0_i32_1 = arith.constant 0 : i32
    return %c0_i32, %c0_i32_0 : i32, i32
  }
  func.func @transform_3(%arg0: i32) -> (i32, i32, i32) {
    %c0_i32 = arith.constant 0 : i32
    %c0_i32_0 = arith.constant 0 : i32
    %c0_i32_1 = arith.constant 0 : i32
    return %arg0, %c0_i32, %c0_i32_0 : i32, i32, i32
  }
}

</mosaic_0001>

<llo_original>
// kernel: vision_transformer_forward.5
$region0: #{vision_transformer_forward.5}
  #allocation0 [shape = 'u32[]', space=smem, size = 0x4, offset = 0x4, fixed_abs, tag = 'smem constant byte address 0x4 - core index']
  #allocation1 [shape = 'u32[72,128]{1,0:T(1,128)}', space=vmem, size = 0x9000, scoped, tag = 'internal scratch']
  %s0 = inlined_call_operand.vmem [shape: bf16[2,16,32], index: 0, kind: input, shape index: {}]
  %s1 = inlined_call_operand.vmem [shape: f32[2,32], index: 1, kind: input, shape index: {}]
  %s2 = inlined_call_operand.vmem [shape: bf16[32,16], index: 2, kind: input, shape index: {}]
  %s3 = inlined_call_operand.vmem [shape: f32[2,16,16], index: 3, kind: output, shape index: {}]
  %s4 = sld [smem:[#allocation0]]
  $region45: #{vision_transformer_forward.5} parent=0
    _
  %s6 = ssub.s32 1, %s4
  %s7 = scalar_select 0, %s6, %s4
  loop: start=0, step=1, limit=4
  $region2: #{vision_transformer_forward.5} parent=0 // loop_pre_header
    _
  $region3: #{vision_transformer_forward.5} parent=0 // loop_header
    %s9 = sphi 0, %s13
    %p10 = scmp.ge.s32.totalorder %s9, 4
    %s19 = sphi 0, %s21
    %s22 = sphi 0, %s19
    %s23 = sphi 0, %s22
    %s39 = sphi 0, %s23
    %s43 = sphi 0, %s43
    %s45 = sphi 0, %s43
    %s46 = sphi 0, %s45
    %s60 = sphi 0, %s46
    %s64 = sphi 0, %s64
    %s66 = sphi 0, %s64
    %s67 = sphi 0, %s66
    %s81 = sphi 0, %s67
    %s87 = sphi 0, %s89
    %s90 = sphi 0, %s87
    %s91 = sphi 0, %s90
    %s107 = sphi 0, %s91
  $region4: #{vision_transformer_forward.5} parent=0 // loop_header_branch
    %12 = sbr.rel (%p10) target = $region8
  $region5: #{vision_transformer_forward.5} parent=0 // loop_body
    %s14 = ssub.s32 %s9, 1
    %s15 = ssub.s32 %s9, 2
    %s16 = sadd.s32 %s9, 1
    %s17 = ssub.s32 %s9, %s16
    %p18 = scmp.eq.s32.totalorder %s17, 0
    %s20 = sadd.s32 %s19, 1
    %s21 = scalar_select %p18, %s19, %s20
    %p24 = pneg %p18
    %p25 = scmp.eq.s32.totalorder %s9, 1
    %p26 = por %p24, %p25
    %p27 = scmp.ne.s32.totalorder %s19, %s22
    %p28 = scmp.eq.s32.totalorder %s9, 0
    %p29 = por %p27, %p28
    %p30 = scmp.ne.s32.totalorder %s19, %s22
    %p31 = scmp.eq.s32.totalorder %s14, 1
    %p32 = por %p30, %p31
    %p33 = scmp.ne.s32.totalorder %s22, %s23
    %p34 = scmp.eq.s32.totalorder %s14, 0
    %p35 = por %p33, %p34
    %p36 = scmp.ne.s32.totalorder %s22, %s23
    %p37 = scmp.eq.s32.totalorder %s15, 1
    %p38 = por %p36, %p37
    %p40 = scmp.ne.s32.totalorder %s23, %s39
    %p41 = scmp.eq.s32.totalorder %s15, 0
    %p42 = por %p40, %p41
    %s44 = sadd.s32 %s43, 1
    %p47 = scmp.eq.s32.totalorder %s9, 1
    %p48 = scmp.ne.s32.totalorder %s43, %s45
    %p49 = scmp.eq.s32.totalorder %s9, 0
    %p50 = por %p48, %p49
    %p51 = scmp.ne.s32.totalorder %s43, %s45
    %p52 = scmp.eq.s32.totalorder %s14, 1
    %p53 = por %p51, %p52
    %p54 = scmp.ne.s32.totalorder %s45, %s46
    %p55 = scmp.eq.s32.totalorder %s14, 0
    %p56 = por %p54, %p55
    %p57 = scmp.ne.s32.totalorder %s45, %s46
    %p58 = scmp.eq.s32.totalorder %s15, 1
    %p59 = por %p57, %p58
    %p61 = scmp.ne.s32.totalorder %s46, %s60
    %p62 = scmp.eq.s32.totalorder %s15, 0
    %p63 = por %p61, %p62
    %s65 = sadd.s32 %s64, 1
    %p68 = scmp.eq.s32.totalorder %s9, 1
    %p69 = scmp.ne.s32.totalorder %s64, %s66
    %p70 = scmp.eq.s32.totalorder %s9, 0
    %p71 = por %p69, %p70
    %p72 = scmp.ne.s32.totalorder %s64, %s66
    %p73 = scmp.eq.s32.totalorder %s14, 1
    %p74 = por %p72, %p73
    %p75 = scmp.ne.s32.totalorder %s66, %s67
    %p76 = scmp.eq.s32.totalorder %s14, 0
    %p77 = por %p75, %p76
    %p78 = scmp.ne.s32.totalorder %s66, %s67
    %p79 = scmp.eq.s32.totalorder %s15, 1
    %p80 = por %p78, %p79
    %p82 = scmp.ne.s32.totalorder %s67, %s81
    %p83 = scmp.eq.s32.totalorder %s15, 0
    %p84 = por %p82, %p83
    %s85 = ssub.s32 %s9, %s16
    %p86 = scmp.eq.s32.totalorder %s85, 0
    %s88 = sadd.s32 %s87, 1
    %s89 = scalar_select %p86, %s87, %s88
    %p92 = pneg %p86
    %p93 = scmp.eq.s32.totalorder %s9, 1
    %p94 = por %p92, %p93
    %p95 = scmp.ne.s32.totalorder %s87, %s90
    %p96 = scmp.eq.s32.totalorder %s9, 0
    %p97 = por %p95, %p96
    %p98 = scmp.ne.s32.totalorder %s87, %s90
    %p99 = scmp.eq.s32.totalorder %s14, 1
    %p100 = por %p98, %p99
    %p101 = scmp.ne.s32.totalorder %s90, %s91
    %p102 = scmp.eq.s32.totalorder %s14, 0
    %p103 = por %p101, %p102
    %p104 = scmp.ne.s32.totalorder %s90, %s91
    %p105 = scmp.eq.s32.totalorder %s15, 1
    %p106 = por %p104, %p105
    %p108 = scmp.ne.s32.totalorder %s91, %s107
    %p109 = scmp.eq.s32.totalorder %s15, 0
    %p110 = por %p108, %p109
    %p111 = scmp.le.s32.totalorder 1, %s9
    %p112 = scmp.lt.s32.totalorder %s9, 3
    %p113 = pnand %p111, %p112
    %p114 = pneg %p113
    // Predicated region
    $region9: #{vision_transformer_forward.5} parent=5 // pred_check
      _
    $region10: #{vision_transformer_forward.5} parent=5 // pred_check_branch
      %116 = sbr.rel (%p113) target = $region12
    $region11: #{vision_transformer_forward.5} parent=5 // pred_region
      %s117 = ssub.s32 %s9, 1
      // Predicated region
      $region13: #{vision_transformer_forward.5} parent=11 // pred_check
        %p118 = pneg %p56
      $region14: #{vision_transformer_forward.5} parent=11 // pred_check_branch
        %120 = sbr.rel (%p118) target = $region16
      $region15: #{vision_transformer_forward.5} parent=11 // pred_region
        _
      $region16: #{vision_transformer_forward.5} parent=11 // pred_fallthru
        _
      // Predicated region
      $region17: #{vision_transformer_forward.5} parent=11 // pred_check
        %p121 = pneg %p77
      $region18: #{vision_transformer_forward.5} parent=11 // pred_check_branch
        %123 = sbr.rel (%p121) target = $region20
      $region19: #{vision_transformer_forward.5} parent=11 // pred_region
        _
      $region20: #{vision_transformer_forward.5} parent=11 // pred_fallthru
        _
    $region12: #{vision_transformer_forward.5} parent=5 // pred_fallthru
      _
    %p124 = scmp.lt.s32.totalorder %s9, 2
    // Predicated region
    $region21: #{vision_transformer_forward.5} parent=5 // pred_check
      %p125 = pneg %p124
    $region22: #{vision_transformer_forward.5} parent=5 // pred_check_branch
      %127 = sbr.rel (%p125) target = $region24
    $region23: #{vision_transformer_forward.5} parent=5 // pred_region
      // Predicated region
      $region25: #{vision_transformer_forward.5} parent=23 // pred_check
        %p128 = pneg %p29
      $region26: #{vision_transformer_forward.5} parent=23 // pred_check_branch
        %130 = sbr.rel (%p128) target = $region28
      $region27: #{vision_transformer_forward.5} parent=23 // pred_region
        %p131 = scmp.lt.s32.totalorder %s9, 1
        %s132 = scalar_select %p131, %s9, 1
        %s133 = smul.addr %s132, 2
        %s134 = smul.addr %s133, 4
        %s135 = scalar_lea.vmem %s0, %s134
      $region28: #{vision_transformer_forward.5} parent=23 // pred_fallthru
        _
    $region24: #{vision_transformer_forward.5} parent=5 // pred_fallthru
      _
    %p136 = scmp.le.s32.totalorder 1, %s9
    %p137 = scmp.lt.s32.totalorder %s9, 3
    %p138 = pnand %p136, %p137
    %p139 = pneg %p138
    // Predicated region
    $region29: #{vision_transformer_forward.5} parent=5 // pred_check
      _
    $region30: #{vision_transformer_forward.5} parent=5 // pred_check_branch
      %141 = sbr.rel (%p138) target = $region32
    $region31: #{vision_transformer_forward.5} parent=5 // pred_region
      %s142 = ssub.s32 %s9, 1
      %p143 = scmp.lt.s32.totalorder %s14, 1
      %s144 = scalar_select %p143, %s14, 1
      %s145 = smul.addr %s144, 2
      %s146 = smul.addr %s145, 4
      %s147 = scalar_lea.vmem %s0, %s146
      %p148 = pneg %p35
      %p149 = pneg %p32
      %p150 = pneg %p56
      %p151 = pneg %p53
      %p152 = pneg %p77
      %p153 = pneg %p74
      %p154 = pneg %p103
      %p155 = pneg %p100
      %p156 = scmp.lt.s32.totalorder %s14, 1
      %s157 = scalar_select %p156, %s14, 1
      %s158 = smul.addr %s157, 2
      %s159 = smul.addr %s158, 8
      %s160 = scalar_lea.vmem %s3, %s159
      %p161 = scmp.lt.s32.totalorder %s14, 1
      %s162 = scalar_select %p161, %s14, 1
      %s163 = smul.addr %s162, 2
      %s164 = smul.addr %s163, 4
      %s165 = scalar_lea.vmem %s0, %s164
      %p166 = scmp.lt.s32.totalorder %s14, 1
      %s167 = scalar_select %p166, %s14, 1
      %s168 = smul.addr %s167, 2
      %s169 = smul.addr %s168, 8
      %s170 = scalar_lea.vmem %s3, %s169
      %v172 = vld [vmem:[%s165] sm:$0xf]
      %v173 = vld [vmem:[%s165 + $0x4] sm:$0xf]
      %v174 = vld [vmem:[%s1] sm:$0x1]
      %v175 = vld [vmem:[%s1 + $0x1] sm:$0x1]
      %v176 = vunpack.c.l.bf16 %v172
      %v177 = vunpack.c.l.bf16 %v173
      %vm178 = vcmask 261120
      %v179 = vsel %vm178, %v176, 0.0
      %180 = vadd.xlane.f32.xlu0 %v179
      %v181 = vpop.xlane.xlu0 %180
      %v182 = vsel %vm178, %v177, 0.0
      %183 = vadd.xlane.f32.xlu0 %v182
      %v184 = vpop.xlane.xlu0 %183
      %v185 = vrcp.pop 32.0
      %v186 = vmul.f32 32.0, %v185
      %v187 = vsub.f32 1.0, %v186
      %v188 = vmul.f32 %v185, %v187
      %v189 = vadd.f32 %v185, %v188
      %vm190 = vweird.f32 %v185
      %v191 = vsel %vm190, %v185, %v189
      %v192 = vmul.f32 %v181, %v191
      %v193 = vmul.f32 %v184, %v191
      %v194 = vsub.f32 %v176, %v192
      %v195 = vsub.f32 %v177, %v193
      %v196 = vmul.f32 %v194, %v194
      %v197 = vmul.f32 %v195, %v195
      %v198 = vsel %vm178, %v196, 0.0
      %199 = vadd.xlane.f32.xlu0 %v198
      %v200 = vpop.xlane.xlu0 %199
      %v201 = vsel %vm178, %v197, 0.0
      %202 = vadd.xlane.f32.xlu0 %v201
      %v203 = vpop.xlane.xlu0 %202
      %v204 = vmul.f32 %v200, %v191
      %v205 = vmul.f32 %v203, %v191
      %v206 = vadd.f32 %v204, 1e-05
      %v207 = vadd.f32 %v205, 1e-05
      %v208 = vrsqrt.pop %v206
      %v209 = vmul.f32 %v208, %v206
      %v210 = vmul.f32 %v209, %v208
      %v211 = vmul.f32 0.5, %v210
      %v212 = vsub.f32 1.5, %v211
      %v213 = vmul.f32 %v208, %v212
      %vm214 = vweird.f32 %v206
      %vm215 = vweird.f32 %v208
      %vm216 = vmor %vm214, %vm215
      %v217 = vsel %vm216, %v208, %v213
      %v218 = vrsqrt.pop %v207
      %v219 = vmul.f32 %v218, %v207
      %v220 = vmul.f32 %v219, %v218
      %v221 = vmul.f32 0.5, %v220
      %v222 = vsub.f32 1.5, %v221
      %v223 = vmul.f32 %v218, %v222
      %vm224 = vweird.f32 %v207
      %vm225 = vweird.f32 %v218
      %vm226 = vmor %vm224, %vm225
      %v227 = vsel %vm226, %v218, %v223
      %v228 = vmul.f32 %v194, %v217
      %v229 = vmul.f32 %v195, %v227
      %v230 = vperm.slane %v174, 0
      %v231 = vmul.f32 %v228, %v230
      %v232 = vmul.f32 %v229, %v230
      %v233 = vperm.slane %v175, 0
      %v234 = vadd.f32 %v231, %v233
      %v235 = vadd.f32 %v232, %v233
      %v236 = vpack.c.bf16 %v235, %v234
      %v237 = vld [vmem:[%s2] sm:$0xf]
      %v238 = vld [vmem:[%s2 + $0x4] sm:$0xf]
      %v239 = vld [vmem:[%s2 + $0x8] sm:$0xf]
      %v240 = vld [vmem:[%s2 + $0xc] sm:$0xf]
      %v245 = vunpack.c.l.b16 %v237
      %v246 = vunpack.c.l.b16 %v238
      %v247 = vunpack.c.l.b16 %v239
      %v248 = vunpack.c.l.b16 %v240
      %v249 = vpack.c.b16 %v246, %v245
      %v250 = vpack.c.b16 %v248, %v247
      %v254 = vsel %vm178, %v236, 0
      %256 = vmatpush.bf16.msra.mxu0 0
      %257 = vmatpush.bf16.msra.mxu0 0
      %258 = vmatpush.bf16.msra.mxu0 0
      %259 = vmatpush.bf16.msra.mxu0 0
      %260 = vmatpush.bf16.msra.mxu0 0
      %261 = vmatpush.bf16.msra.mxu0 0
      %262 = vmatpush.bf16.msra.mxu0 %v250
      %263 = vmatpush.bf16.msra.mxu0 %v249
      %264 = vmatmul.bf16.gmra.mxu0 %v254
      %v265 = vpop.f32.mrf.mxu0
      %v266 = vadd.f32 0.0, %v265
      %v267 = vpop.f32.mrf.mxu0
      %v268 = vadd.f32 0.0, %v267
      %269 = vdwg.mxu0
      %vm270 = vcmask 130048
      %271 = vst.msk [vmem:[%s170] sm:$0xff] %vm270, %v266
      %272 = vst.msk [vmem:[%s170 + $0x8] sm:$0xff] %vm270, %v268
      %p273 = scmp.lt.s32.totalorder %s14, 1
      %s274 = scalar_select %p273, %s14, 1
      %s275 = smul.addr %s274, 2
      %s276 = smul.addr %s275, 8
      %s277 = scalar_lea.vmem %s3, %s276
      // Predicated region
      $region33: #{vision_transformer_forward.5} parent=31 // pred_check
        %p278 = pneg %p100
      $region34: #{vision_transformer_forward.5} parent=31 // pred_check_branch
        %280 = sbr.rel (%p278) target = $region36
      $region35: #{vision_transformer_forward.5} parent=31 // pred_region
        _
      $region36: #{vision_transformer_forward.5} parent=31 // pred_fallthru
        _
    $region32: #{vision_transformer_forward.5} parent=5 // pred_fallthru
      _
    %p281 = scmp.le.s32.totalorder 2, %s9
    // Predicated region
    $region37: #{vision_transformer_forward.5} parent=5 // pred_check
      %p282 = pneg %p281
    $region38: #{vision_transformer_forward.5} parent=5 // pred_check_branch
      %284 = sbr.rel (%p282) target = $region40
    $region39: #{vision_transformer_forward.5} parent=5 // pred_region
      %s285 = ssub.s32 %s9, 2
      // Predicated region
      $region41: #{vision_transformer_forward.5} parent=39 // pred_check
        %p286 = pneg %p106
      $region42: #{vision_transformer_forward.5} parent=39 // pred_check_branch
        %288 = sbr.rel (%p286) target = $region44
      $region43: #{vision_transformer_forward.5} parent=39 // pred_region
        %p289 = scmp.lt.s32.totalorder %s15, 1
        %s290 = scalar_select %p289, %s15, 1
        %s291 = smul.addr %s290, 2
        %s292 = smul.addr %s291, 8
        %s293 = scalar_lea.vmem %s3, %s292
      $region44: #{vision_transformer_forward.5} parent=39 // pred_fallthru
        _
    $region40: #{vision_transformer_forward.5} parent=5 // pred_fallthru
      _
  $region6: #{vision_transformer_forward.5} parent=0 // loop_footer
    %s13 = sadd.s32 1, %s9
  $region7: #{vision_transformer_forward.5} parent=0 // loop_footer_branch
    %8 = sbr.rel target = $region3
  $region8: #{vision_transformer_forward.5} parent=0 // loop_exit
    _

// kernel: vision_transformer_forward.3
$region0: #{vision_transformer_forward.3}
  #allocation0 [shape = 'u32[]', space=smem, size = 0x4, offset = 0x4, fixed_abs, tag = 'smem constant byte address 0x4 - core index']
  #allocation1 [shape = 'u32[72,128]{1,0:T(1,128)}', space=vmem, size = 0x9000, scoped, tag = 'internal scratch']
  %s0 = inlined_call_operand.vmem [shape: bf16[2,16,256], index: 0, kind: input, shape index: {}]
  %s1 = inlined_call_operand.vmem [shape: bf16[256,32], index: 1, kind: input, shape index: {}]
  %s2 = inlined_call_operand.vmem [shape: f32[16,32], index: 2, kind: input, shape index: {}]
  %s3 = inlined_call_operand.vmem [shape: f32[2,32], index: 3, kind: input, shape index: {}]
  %s4 = inlined_call_operand.vmem [shape: bf16[2,16,32], index: 4, kind: output, shape index: {}]
  %s5 = sld [smem:[#allocation0]]
  $region49: #{vision_transformer_forward.3} parent=0
    _
  %s7 = ssub.s32 1, %s5
  %s8 = scalar_select 0, %s7, %s5
  loop: start=0, step=1, limit=4
  $region2: #{vision_transformer_forward.3} parent=0 // loop_pre_header
    _
  $region3: #{vision_transformer_forward.3} parent=0 // loop_header
    %s10 = sphi 0, %s14
    %p11 = scmp.ge.s32.totalorder %s10, 4
    %s20 = sphi 0, %s22
    %s23 = sphi 0, %s20
    %s24 = sphi 0, %s23
    %s40 = sphi 0, %s24
    %s44 = sphi 0, %s44
    %s46 = sphi 0, %s44
    %s47 = sphi 0, %s46
    %s61 = sphi 0, %s47
    %s65 = sphi 0, %s65
    %s67 = sphi 0, %s65
    %s68 = sphi 0, %s67
    %s82 = sphi 0, %s68
    %s86 = sphi 0, %s86
    %s88 = sphi 0, %s86
    %s89 = sphi 0, %s88
    %s103 = sphi 0, %s89
    %s109 = sphi 0, %s111
    %s112 = sphi 0, %s109
    %s113 = sphi 0, %s112
    %s129 = sphi 0, %s113
  $region4: #{vision_transformer_forward.3} parent=0 // loop_header_branch
    %13 = sbr.rel (%p11) target = $region8
  $region5: #{vision_transformer_forward.3} parent=0 // loop_body
    %s15 = ssub.s32 %s10, 1
    %s16 = ssub.s32 %s10, 2
    %s17 = sadd.s32 %s10, 1
    %s18 = ssub.s32 %s10, %s17
    %p19 = scmp.eq.s32.totalorder %s18, 0
    %s21 = sadd.s32 %s20, 1
    %s22 = scalar_select %p19, %s20, %s21
    %p25 = pneg %p19
    %p26 = scmp.eq.s32.totalorder %s10, 1
    %p27 = por %p25, %p26
    %p28 = scmp.ne.s32.totalorder %s20, %s23
    %p29 = scmp.eq.s32.totalorder %s10, 0
    %p30 = por %p28, %p29
    %p31 = scmp.ne.s32.totalorder %s20, %s23
    %p32 = scmp.eq.s32.totalorder %s15, 1
    %p33 = por %p31, %p32
    %p34 = scmp.ne.s32.totalorder %s23, %s24
    %p35 = scmp.eq.s32.totalorder %s15, 0
    %p36 = por %p34, %p35
    %p37 = scmp.ne.s32.totalorder %s23, %s24
    %p38 = scmp.eq.s32.totalorder %s16, 1
    %p39 = por %p37, %p38
    %p41 = scmp.ne.s32.totalorder %s24, %s40
    %p42 = scmp.eq.s32.totalorder %s16, 0
    %p43 = por %p41, %p42
    %s45 = sadd.s32 %s44, 1
    %p48 = scmp.eq.s32.totalorder %s10, 1
    %p49 = scmp.ne.s32.totalorder %s44, %s46
    %p50 = scmp.eq.s32.totalorder %s10, 0
    %p51 = por %p49, %p50
    %p52 = scmp.ne.s32.totalorder %s44, %s46
    %p53 = scmp.eq.s32.totalorder %s15, 1
    %p54 = por %p52, %p53
    %p55 = scmp.ne.s32.totalorder %s46, %s47
    %p56 = scmp.eq.s32.totalorder %s15, 0
    %p57 = por %p55, %p56
    %p58 = scmp.ne.s32.totalorder %s46, %s47
    %p59 = scmp.eq.s32.totalorder %s16, 1
    %p60 = por %p58, %p59
    %p62 = scmp.ne.s32.totalorder %s47, %s61
    %p63 = scmp.eq.s32.totalorder %s16, 0
    %p64 = por %p62, %p63
    %s66 = sadd.s32 %s65, 1
    %p69 = scmp.eq.s32.totalorder %s10, 1
    %p70 = scmp.ne.s32.totalorder %s65, %s67
    %p71 = scmp.eq.s32.totalorder %s10, 0
    %p72 = por %p70, %p71
    %p73 = scmp.ne.s32.totalorder %s65, %s67
    %p74 = scmp.eq.s32.totalorder %s15, 1
    %p75 = por %p73, %p74
    %p76 = scmp.ne.s32.totalorder %s67, %s68
    %p77 = scmp.eq.s32.totalorder %s15, 0
    %p78 = por %p76, %p77
    %p79 = scmp.ne.s32.totalorder %s67, %s68
    %p80 = scmp.eq.s32.totalorder %s16, 1
    %p81 = por %p79, %p80
    %p83 = scmp.ne.s32.totalorder %s68, %s82
    %p84 = scmp.eq.s32.totalorder %s16, 0
    %p85 = por %p83, %p84
    %s87 = sadd.s32 %s86, 1
    %p90 = scmp.eq.s32.totalorder %s10, 1
    %p91 = scmp.ne.s32.totalorder %s86, %s88
    %p92 = scmp.eq.s32.totalorder %s10, 0
    %p93 = por %p91, %p92
    %p94 = scmp.ne.s32.totalorder %s86, %s88
    %p95 = scmp.eq.s32.totalorder %s15, 1
    %p96 = por %p94, %p95
    %p97 = scmp.ne.s32.totalorder %s88, %s89
    %p98 = scmp.eq.s32.totalorder %s15, 0
    %p99 = por %p97, %p98
    %p100 = scmp.ne.s32.totalorder %s88, %s89
    %p101 = scmp.eq.s32.totalorder %s16, 1
    %p102 = por %p100, %p101
    %p104 = scmp.ne.s32.totalorder %s89, %s103
    %p105 = scmp.eq.s32.totalorder %s16, 0
    %p106 = por %p104, %p105
    %s107 = ssub.s32 %s10, %s17
    %p108 = scmp.eq.s32.totalorder %s107, 0
    %s110 = sadd.s32 %s109, 1
    %s111 = scalar_select %p108, %s109, %s110
    %p114 = pneg %p108
    %p115 = scmp.eq.s32.totalorder %s10, 1
    %p116 = por %p114, %p115
    %p117 = scmp.ne.s32.totalorder %s109, %s112
    %p118 = scmp.eq.s32.totalorder %s10, 0
    %p119 = por %p117, %p118
    %p120 = scmp.ne.s32.totalorder %s109, %s112
    %p121 = scmp.eq.s32.totalorder %s15, 1
    %p122 = por %p120, %p121
    %p123 = scmp.ne.s32.totalorder %s112, %s113
    %p124 = scmp.eq.s32.totalorder %s15, 0
    %p125 = por %p123, %p124
    %p126 = scmp.ne.s32.totalorder %s112, %s113
    %p127 = scmp.eq.s32.totalorder %s16, 1
    %p128 = por %p126, %p127
    %p130 = scmp.ne.s32.totalorder %s113, %s129
    %p131 = scmp.eq.s32.totalorder %s16, 0
    %p132 = por %p130, %p131
    %p133 = scmp.le.s32.totalorder 1, %s10
    %p134 = scmp.lt.s32.totalorder %s10, 3
    %p135 = pnand %p133, %p134
    %p136 = pneg %p135
    // Predicated region
    $region9: #{vision_transformer_forward.3} parent=5 // pred_check
      _
    $region10: #{vision_transformer_forward.3} parent=5 // pred_check_branch
      %138 = sbr.rel (%p135) target = $region12
    $region11: #{vision_transformer_forward.3} parent=5 // pred_region
      %s139 = ssub.s32 %s10, 1
      // Predicated region
      $region13: #{vision_transformer_forward.3} parent=11 // pred_check
        %p140 = pneg %p57
      $region14: #{vision_transformer_forward.3} parent=11 // pred_check_branch
        %142 = sbr.rel (%p140) target = $region16
      $region15: #{vision_transformer_forward.3} parent=11 // pred_region
        _
      $region16: #{vision_transformer_forward.3} parent=11 // pred_fallthru
        _
      // Predicated region
      $region17: #{vision_transformer_forward.3} parent=11 // pred_check
        %p143 = pneg %p78
      $region18: #{vision_transformer_forward.3} parent=11 // pred_check_branch
        %145 = sbr.rel (%p143) target = $region20
      $region19: #{vision_transformer_forward.3} parent=11 // pred_region
        _
      $region20: #{vision_transformer_forward.3} parent=11 // pred_fallthru
        _
      // Predicated region
      $region21: #{vision_transformer_forward.3} parent=11 // pred_check
        %p146 = pneg %p99
      $region22: #{vision_transformer_forward.3} parent=11 // pred_check_branch
        %148 = sbr.rel (%p146) target = $region24
      $region23: #{vision_transformer_forward.3} parent=11 // pred_region
        _
      $region24: #{vision_transformer_forward.3} parent=11 // pred_fallthru
        _
    $region12: #{vision_transformer_forward.3} parent=5 // pred_fallthru
      _
    %p149 = scmp.lt.s32.totalorder %s10, 2
    // Predicated region
    $region25: #{vision_transformer_forward.3} parent=5 // pred_check
      %p150 = pneg %p149
    $region26: #{vision_transformer_forward.3} parent=5 // pred_check_branch
      %152 = sbr.rel (%p150) target = $region28
    $region27: #{vision_transformer_forward.3} parent=5 // pred_region
      // Predicated region
      $region29: #{vision_transformer_forward.3} parent=27 // pred_check
        %p153 = pneg %p30
      $region30: #{vision_transformer_forward.3} parent=27 // pred_check_branch
        %155 = sbr.rel (%p153) target = $region32
      $region31: #{vision_transformer_forward.3} parent=27 // pred_region
        %p156 = scmp.lt.s32.totalorder %s10, 1
        %s157 = scalar_select %p156, %s10, 1
        %s158 = smul.addr %s157, 4
        %s159 = smul.addr %s158, 4
        %s160 = scalar_lea.vmem %s0, %s159
      $region32: #{vision_transformer_forward.3} parent=27 // pred_fallthru
        _
    $region28: #{vision_transformer_forward.3} parent=5 // pred_fallthru
      _
    %p161 = scmp.le.s32.totalorder 1, %s10
    %p162 = scmp.lt.s32.totalorder %s10, 3
    %p163 = pnand %p161, %p162
    %p164 = pneg %p163
    // Predicated region
    $region33: #{vision_transformer_forward.3} parent=5 // pred_check
      _
    $region34: #{vision_transformer_forward.3} parent=5 // pred_check_branch
      %166 = sbr.rel (%p163) target = $region36
    $region35: #{vision_transformer_forward.3} parent=5 // pred_region
      %s167 = ssub.s32 %s10, 1
      %p168 = scmp.lt.s32.totalorder %s15, 1
      %s169 = scalar_select %p168, %s15, 1
      %s170 = smul.addr %s169, 4
      %s171 = smul.addr %s170, 4
      %s172 = scalar_lea.vmem %s0, %s171
      %p173 = pneg %p36
      %p174 = pneg %p33
      %p175 = pneg %p57
      %p176 = pneg %p54
      %p177 = pneg %p78
      %p178 = pneg %p75
      %p179 = pneg %p99
      %p180 = pneg %p96
      %p181 = pneg %p125
      %p182 = pneg %p122
      %p183 = scmp.lt.s32.totalorder %s15, 1
      %s184 = scalar_select %p183, %s15, 1
      %s185 = smul.addr %s184, 2
      %s186 = smul.addr %s185, 4
      %s187 = scalar_lea.vmem %s4, %s186
      %p188 = scmp.lt.s32.totalorder %s15, 1
      %s189 = scalar_select %p188, %s15, 1
      %s190 = smul.addr %s189, 4
      %s191 = smul.addr %s190, 4
      %s192 = scalar_lea.vmem %s0, %s191
      %p193 = scmp.lt.s32.totalorder %s15, 1
      %s194 = scalar_select %p193, %s15, 1
      %s195 = smul.addr %s194, 2
      %s196 = smul.addr %s195, 4
      %s197 = scalar_lea.vmem %s4, %s196
      %v198 = vld [vmem:[%s192] sm:$0xff]
      %v199 = vld [vmem:[%s192 + $0x8] sm:$0xff]
      %v200 = vld [vmem:[%s1] sm:$0xf]
      %v201 = vld [vmem:[%s1 + $0x4] sm:$0xf]
      %v202 = vld [vmem:[%s1 + $0x8] sm:$0xf]
      %v203 = vld [vmem:[%s1 + $0xc] sm:$0xf]
      %v204 = vld [vmem:[%s1 + $0x10] sm:$0xf]
      %v205 = vld [vmem:[%s1 + $0x14] sm:$0xf]
      %v206 = vld [vmem:[%s1 + $0x18] sm:$0xf]
      %v207 = vld [vmem:[%s1 + $0x1c] sm:$0xf]
      %v208 = vld [vmem:[%s1 + $0x20] sm:$0xf]
      %v209 = vld [vmem:[%s1 + $0x24] sm:$0xf]
      %v210 = vld [vmem:[%s1 + $0x28] sm:$0xf]
      %v211 = vld [vmem:[%s1 + $0x2c] sm:$0xf]
      %v212 = vld [vmem:[%s1 + $0x30] sm:$0xf]
      %v213 = vld [vmem:[%s1 + $0x34] sm:$0xf]
      %v214 = vld [vmem:[%s1 + $0x38] sm:$0xf]
      %v215 = vld [vmem:[%s1 + $0x3c] sm:$0xf]
      %v216 = vld [vmem:[%s1 + $0x40] sm:$0xf]
      %v217 = vld [vmem:[%s1 + $0x44] sm:$0xf]
      %v218 = vld [vmem:[%s1 + $0x48] sm:$0xf]
      %v219 = vld [vmem:[%s1 + $0x4c] sm:$0xf]
      %v220 = vld [vmem:[%s1 + $0x50] sm:$0xf]
      %v221 = vld [vmem:[%s1 + $0x54] sm:$0xf]
      %v222 = vld [vmem:[%s1 + $0x58] sm:$0xf]
      %v223 = vld [vmem:[%s1 + $0x5c] sm:$0xf]
      %v224 = vld [vmem:[%s1 + $0x60] sm:$0xf]
      %v225 = vld [vmem:[%s1 + $0x64] sm:$0xf]
      %v226 = vld [vmem:[%s1 + $0x68] sm:$0xf]
      %v227 = vld [vmem:[%s1 + $0x6c] sm:$0xf]
      %v228 = vld [vmem:[%s1 + $0x70] sm:$0xf]
      %v229 = vld [vmem:[%s1 + $0x74] sm:$0xf]
      %v230 = vld [vmem:[%s1 + $0x78] sm:$0xf]
      %v231 = vld [vmem:[%s1 + $0x7c] sm:$0xf]
      %v232 = vld [vmem:[%s2] sm:$0xff]
      %v233 = vld [vmem:[%s2 + $0x8] sm:$0xff]
      %v236 = vunpack.c.l.b16 %v198
      %v237 = vunpack.c.h.b16 %v198
      %v238 = vunpack.c.l.b16 %v199
      %v239 = vunpack.c.h.b16 %v199
      %v240 = vpack.c.b16 %v238, %v236
      %v241 = vpack.c.b16 %v239, %v237
      %v276 = vunpack.c.l.b16 %v200
      %v277 = vunpack.c.l.b16 %v201
      %v278 = vunpack.c.l.b16 %v202
      %v279 = vunpack.c.l.b16 %v203
      %v280 = vunpack.c.l.b16 %v204
      %v281 = vunpack.c.l.b16 %v205
      %v282 = vunpack.c.l.b16 %v206
      %v283 = vunpack.c.l.b16 %v207
      %v284 = vunpack.c.l.b16 %v208
      %v285 = vunpack.c.l.b16 %v209
      %v286 = vunpack.c.l.b16 %v210
      %v287 = vunpack.c.l.b16 %v211
      %v288 = vunpack.c.l.b16 %v212
      %v289 = vunpack.c.l.b16 %v213
      %v290 = vunpack.c.l.b16 %v214
      %v291 = vunpack.c.l.b16 %v215
      %v292 = vunpack.c.l.b16 %v216
      %v293 = vunpack.c.l.b16 %v217
      %v294 = vunpack.c.l.b16 %v218
      %v295 = vunpack.c.l.b16 %v219
      %v296 = vunpack.c.l.b16 %v220
      %v297 = vunpack.c.l.b16 %v221
      %v298 = vunpack.c.l.b16 %v222
      %v299 = vunpack.c.l.b16 %v223
      %v300 = vunpack.c.l.b16 %v224
      %v301 = vunpack.c.l.b16 %v225
      %v302 = vunpack.c.l.b16 %v226
      %v303 = vunpack.c.l.b16 %v227
      %v304 = vunpack.c.l.b16 %v228
      %v305 = vunpack.c.l.b16 %v229
      %v306 = vunpack.c.l.b16 %v230
      %v307 = vunpack.c.l.b16 %v231
      %v308 = vpack.c.b16 %v277, %v276
      %v309 = vpack.c.b16 %v279, %v278
      %v310 = vpack.c.b16 %v281, %v280
      %v311 = vpack.c.b16 %v283, %v282
      %v312 = vpack.c.b16 %v285, %v284
      %v313 = vpack.c.b16 %v287, %v286
      %v314 = vpack.c.b16 %v289, %v288
      %v315 = vpack.c.b16 %v291, %v290
      %v316 = vpack.c.b16 %v293, %v292
      %v317 = vpack.c.b16 %v295, %v294
      %v318 = vpack.c.b16 %v297, %v296
      %v319 = vpack.c.b16 %v299, %v298
      %v320 = vpack.c.b16 %v301, %v300
      %v321 = vpack.c.b16 %v303, %v302
      %v322 = vpack.c.b16 %v305, %v304
      %v323 = vpack.c.b16 %v307, %v306
      %340 = vmatpush.bf16.msra.mxu0 %v315
      %341 = vmatpush.bf16.msra.mxu0 %v314
      %342 = vmatpush.bf16.msra.mxu0 %v313
      %343 = vmatpush.bf16.msra.mxu0 %v312
      %344 = vmatpush.bf16.msra.mxu0 %v311
      %345 = vmatpush.bf16.msra.mxu0 %v310
      %346 = vmatpush.bf16.msra.mxu0 %v309
      %347 = vmatpush.bf16.msra.mxu0 %v308
      %348 = vmatmul.bf16.gmra.mxu0 %v240
      %v349 = vpop.f32.mrf.mxu0
      %v350 = vadd.f32 %v232, %v349
      %v351 = vpop.f32.mrf.mxu0
      %v352 = vadd.f32 %v233, %v351
      %353 = vdwg.mxu0
      %354 = vmatpush.bf16.msra.mxu0 %v323
      %355 = vmatpush.bf16.msra.mxu0 %v322
      %356 = vmatpush.bf16.msra.mxu0 %v321
      %357 = vmatpush.bf16.msra.mxu0 %v320
      %358 = vmatpush.bf16.msra.mxu0 %v319
      %359 = vmatpush.bf16.msra.mxu0 %v318
      %360 = vmatpush.bf16.msra.mxu0 %v317
      %361 = vmatpush.bf16.msra.mxu0 %v316
      %362 = vmatmul.bf16.gmra.mxu0 %v241
      %v363 = vpop.f32.mrf.mxu0
      %v364 = vadd.f32 %v350, %v363
      %v365 = vpop.f32.mrf.mxu0
      %v366 = vadd.f32 %v352, %v365
      %367 = vdwg.mxu0
      %v368 = vld [vmem:[%s3] sm:$0x1]
      %v369 = vld [vmem:[%s3 + $0x1] sm:$0x1]
      %vm370 = vcmask 261120
      %v371 = vsel %vm370, %v364, 0.0
      %372 = vadd.xlane.f32.xlu0 %v371
      %v373 = vpop.xlane.xlu0 %372
      %v374 = vsel %vm370, %v366, 0.0
      %375 = vadd.xlane.f32.xlu0 %v374
      %v376 = vpop.xlane.xlu0 %375
      %v377 = vrcp.pop 32.0
      %v378 = vmul.f32 32.0, %v377
      %v379 = vsub.f32 1.0, %v378
      %v380 = vmul.f32 %v377, %v379
      %v381 = vadd.f32 %v377, %v380
      %vm382 = vweird.f32 %v377
      %v383 = vsel %vm382, %v377, %v381
      %v384 = vmul.f32 %v373, %v383
      %v385 = vmul.f32 %v376, %v383
      %v386 = vsub.f32 %v364, %v384
      %v387 = vsub.f32 %v366, %v385
      %v388 = vmul.f32 %v386, %v386
      %v389 = vmul.f32 %v387, %v387
      %v390 = vsel %vm370, %v388, 0.0
      %391 = vadd.xlane.f32.xlu0 %v390
      %v392 = vpop.xlane.xlu0 %391
      %v393 = vsel %vm370, %v389, 0.0
      %394 = vadd.xlane.f32.xlu0 %v393
      %v395 = vpop.xlane.xlu0 %394
      %v396 = vmul.f32 %v392, %v383
      %v397 = vmul.f32 %v395, %v383
      %v398 = vadd.f32 %v396, 1e-05
      %v399 = vadd.f32 %v397, 1e-05
      %v400 = vrsqrt.pop %v398
      %v401 = vmul.f32 %v400, %v398
      %v402 = vmul.f32 %v401, %v400
      %v403 = vmul.f32 0.5, %v402
      %v404 = vsub.f32 1.5, %v403
      %v405 = vmul.f32 %v400, %v404
      %vm406 = vweird.f32 %v398
      %vm407 = vweird.f32 %v400
      %vm408 = vmor %vm406, %vm407
      %v409 = vsel %vm408, %v400, %v405
      %v410 = vrsqrt.pop %v399
      %v411 = vmul.f32 %v410, %v399
      %v412 = vmul.f32 %v411, %v410
      %v413 = vmul.f32 0.5, %v412
      %v414 = vsub.f32 1.5, %v413
      %v415 = vmul.f32 %v410, %v414
      %vm416 = vweird.f32 %v399
      %vm417 = vweird.f32 %v410
      %vm418 = vmor %vm416, %vm417
      %v419 = vsel %vm418, %v410, %v415
      %v420 = vmul.f32 %v386, %v409
      %v421 = vmul.f32 %v387, %v419
      %v422 = vperm.slane %v368, 0
      %v423 = vmul.f32 %v420, %v422
      %v424 = vmul.f32 %v421, %v422
      %v425 = vperm.slane %v369, 0
      %v426 = vadd.f32 %v423, %v425
      %v427 = vadd.f32 %v424, %v425
      %v428 = vpack.c.bf16 %v426, %v426
      %v429 = vpack.c.bf16 %v427, %v427
      %vm430 = vcmask 257024
      %431 = vst.msk [vmem:[%s197] sm:$0xf] %vm430, %v428
      %432 = vst.msk [vmem:[%s197 + $0x4] sm:$0xf] %vm430, %v429
      %p433 = scmp.lt.s32.totalorder %s15, 1
      %s434 = scalar_select %p433, %s15, 1
      %s435 = smul.addr %s434, 2
      %s436 = smul.addr %s435, 4
      %s437 = scalar_lea.vmem %s4, %s436
      // Predicated region
      $region37: #{vision_transformer_forward.3} parent=35 // pred_check
        %p438 = pneg %p122
      $region38: #{vision_transformer_forward.3} parent=35 // pred_check_branch
        %440 = sbr.rel (%p438) target = $region40
      $region39: #{vision_transformer_forward.3} parent=35 // pred_region
        _
      $region40: #{vision_transformer_forward.3} parent=35 // pred_fallthru
        _
    $region36: #{vision_transformer_forward.3} parent=5 // pred_fallthru
      _
    %p441 = scmp.le.s32.totalorder 2, %s10
    // Predicated region
    $region41: #{vision_transformer_forward.3} parent=5 // pred_check
      %p442 = pneg %p441
    $region42: #{vision_transformer_forward.3} parent=5 // pred_check_branch
      %444 = sbr.rel (%p442) target = $region44
    $region43: #{vision_transformer_forward.3} parent=5 // pred_region
      %s445 = ssub.s32 %s10, 2
      // Predicated region
      $region45: #{vision_transformer_forward.3} parent=43 // pred_check
        %p446 = pneg %p128
      $region46: #{vision_transformer_forward.3} parent=43 // pred_check_branch
        %448 = sbr.rel (%p446) target = $region48
      $region47: #{vision_transformer_forward.3} parent=43 // pred_region
        %p449 = scmp.lt.s32.totalorder %s16, 1
        %s450 = scalar_select %p449, %s16, 1
        %s451 = smul.addr %s450, 2
        %s452 = smul.addr %s451, 4
        %s453 = scalar_lea.vmem %s4, %s452
      $region48: #{vision_transformer_forward.3} parent=43 // pred_fallthru
        _
    $region44: #{vision_transformer_forward.3} parent=5 // pred_fallthru
      _
  $region6: #{vision_transformer_forward.3} parent=0 // loop_footer
    %s14 = sadd.s32 1, %s10
  $region7: #{vision_transformer_forward.3} parent=0 // loop_footer_branch
    %9 = sbr.rel target = $region3
  $region8: #{vision_transformer_forward.3} parent=0 // loop_exit
    _

// kernel: vision_transformer_forward.4
$region0: #{vision_transformer_forward.4}
  #allocation0 [shape = 'u32[]', space=smem, size = 0x4, offset = 0x4, fixed_abs, tag = 'smem constant byte address 0x4 - core index']
  #allocation1 [shape = 'u32[72,128]{1,0:T(1,128)}', space=vmem, size = 0x9000, scoped, tag = 'internal scratch']
  #allocation2 [shape = 'f32[16,32]{1,0:T(8,128)}', space=vmem, size = 0x2000, scoped, tag = 'scratch operand']
  %s0 = inlined_call_operand.vmem [shape: bf16[2,16,32], index: 0, kind: input, shape index: {}]
  %s1 = inlined_call_operand.vmem [shape: f32[2,8,32], index: 1, kind: input, shape index: {}]
  %s2 = inlined_call_operand.vmem [shape: bf16[2,32,96], index: 2, kind: input, shape index: {}]
  %s3 = inlined_call_operand.vmem [shape: f32[2,1,96], index: 3, kind: input, shape index: {}]
  %s4 = inlined_call_operand.vmem [shape: bf16[2,32,32], index: 4, kind: input, shape index: {}]
  %s5 = inlined_call_operand.vmem [shape: bf16[2,32,128], index: 5, kind: input, shape index: {}]
  %s6 = inlined_call_operand.vmem [shape: f32[2,1,128], index: 6, kind: input, shape index: {}]
  %s7 = inlined_call_operand.vmem [shape: bf16[2,128,32], index: 7, kind: input, shape index: {}]
  %s8 = inlined_call_operand.vmem [shape: bf16[2,16,32], index: 8, kind: output, shape index: {}]
  %s9 = sld [smem:[#allocation0]]
  $region73: #{vision_transformer_forward.4} parent=0
    _
  %s11 = ssub.s32 1, %s9
  %s12 = scalar_select 0, %s11, %s9
  loop: start=0, step=1, limit=6
  $region2: #{vision_transformer_forward.4} parent=0 // loop_pre_header
    _
  $region3: #{vision_transformer_forward.4} parent=0 // loop_header
    %s14 = sphi 0, %s18
    %p15 = scmp.ge.s32.totalorder %s14, 6
    %s21 = sphi 0, %s33
    %s22 = sphi 0, %s29
    %s23 = sphi 0, %s21
    %s24 = sphi 0, %s22
    %s25 = sphi 0, %s23
    %s26 = sphi 0, %s24
    %s36 = sphi 0, %s38
    %s39 = sphi 0, %s36
    %s40 = sphi 0, %s39
    %s56 = sphi 0, %s40
    %s62 = sphi 0, %s64
    %s65 = sphi 0, %s62
    %s66 = sphi 0, %s65
    %s82 = sphi 0, %s66
    %s88 = sphi 0, %s90
    %s91 = sphi 0, %s88
    %s92 = sphi 0, %s91
    %s108 = sphi 0, %s92
    %s114 = sphi 0, %s116
    %s117 = sphi 0, %s114
    %s118 = sphi 0, %s117
    %s134 = sphi 0, %s118
    %s140 = sphi 0, %s142
    %s143 = sphi 0, %s140
    %s144 = sphi 0, %s143
    %s160 = sphi 0, %s144
    %s166 = sphi 0, %s168
    %s169 = sphi 0, %s166
    %s170 = sphi 0, %s169
    %s186 = sphi 0, %s170
    %s192 = sphi 0, %s194
    %s195 = sphi 0, %s192
    %s196 = sphi 0, %s195
    %s212 = sphi 0, %s196
    %s218 = sphi 0, %s220
    %s221 = sphi 0, %s218
    %s222 = sphi 0, %s221
    %s238 = sphi 0, %s222
    %s244 = sphi 0, %s246
    %s247 = sphi 0, %s244
    %s248 = sphi 0, %s247
    %s264 = sphi 0, %s248
  $region4: #{vision_transformer_forward.4} parent=0 // loop_header_branch
    %17 = sbr.rel (%p15) target = $region8
  $region5: #{vision_transformer_forward.4} parent=0 // loop_body
    %s19 = ssub.s32 %s14, 1
    %s20 = ssub.s32 %s14, 2
    %s27 = sadd.s32 1, %s22
    %p28 = scmp.ge.s32.totalorder %s27, 2
    %s29 = scalar_select %p28, 0, %s27
    %s30 = sadd.s32 1, %s21
    %s31 = scalar_select %p28, %s30, %s21
    %p32 = scmp.ge.s32.totalorder %s31, 2
    %s33 = scalar_select %p32, 0, %s31
    %s34 = ssub.s32 %s21, %s33
    %p35 = scmp.eq.s32.totalorder %s34, 0
    %s37 = sadd.s32 %s36, 1
    %s38 = scalar_select %p35, %s36, %s37
    %p41 = pneg %p35
    %p42 = scmp.eq.s32.totalorder %s14, 3
    %p43 = por %p41, %p42
    %p44 = scmp.ne.s32.totalorder %s36, %s39
    %p45 = scmp.eq.s32.totalorder %s14, 0
    %p46 = por %p44, %p45
    %p47 = scmp.ne.s32.totalorder %s36, %s39
    %p48 = scmp.eq.s32.totalorder %s19, 3
    %p49 = por %p47, %p48
    %p50 = scmp.ne.s32.totalorder %s39, %s40
    %p51 = scmp.eq.s32.totalorder %s19, 0
    %p52 = por %p50, %p51
    %p53 = scmp.ne.s32.totalorder %s39, %s40
    %p54 = scmp.eq.s32.totalorder %s20, 3
    %p55 = por %p53, %p54
    %p57 = scmp.ne.s32.totalorder %s40, %s56
    %p58 = scmp.eq.s32.totalorder %s20, 0
    %p59 = por %p57, %p58
    %s60 = ssub.s32 %s22, %s29
    %p61 = scmp.eq.s32.totalorder %s60, 0
    %s63 = sadd.s32 %s62, 1
    %s64 = scalar_select %p61, %s62, %s63
    %p67 = pneg %p61
    %p68 = scmp.eq.s32.totalorder %s14, 3
    %p69 = por %p67, %p68
    %p70 = scmp.ne.s32.totalorder %s62, %s65
    %p71 = scmp.eq.s32.totalorder %s14, 0
    %p72 = por %p70, %p71
    %p73 = scmp.ne.s32.totalorder %s62, %s65
    %p74 = scmp.eq.s32.totalorder %s19, 3
    %p75 = por %p73, %p74
    %p76 = scmp.ne.s32.totalorder %s65, %s66
    %p77 = scmp.eq.s32.totalorder %s19, 0
    %p78 = por %p76, %p77
    %p79 = scmp.ne.s32.totalorder %s65, %s66
    %p80 = scmp.eq.s32.totalorder %s20, 3
    %p81 = por %p79, %p80
    %p83 = scmp.ne.s32.totalorder %s66, %s82
    %p84 = scmp.eq.s32.totalorder %s20, 0
    %p85 = por %p83, %p84
    %s86 = ssub.s32 %s22, %s29
    %p87 = scmp.eq.s32.totalorder %s86, 0
    %s89 = sadd.s32 %s88, 1
    %s90 = scalar_select %p87, %s88, %s89
    %p93 = pneg %p87
    %p94 = scmp.eq.s32.totalorder %s14, 3
    %p95 = por %p93, %p94
    %p96 = scmp.ne.s32.totalorder %s88, %s91
    %p97 = scmp.eq.s32.totalorder %s14, 0
    %p98 = por %p96, %p97
    %p99 = scmp.ne.s32.totalorder %s88, %s91
    %p100 = scmp.eq.s32.totalorder %s19, 3
    %p101 = por %p99, %p100
    %p102 = scmp.ne.s32.totalorder %s91, %s92
    %p103 = scmp.eq.s32.totalorder %s19, 0
    %p104 = por %p102, %p103
    %p105 = scmp.ne.s32.totalorder %s91, %s92
    %p106 = scmp.eq.s32.totalorder %s20, 3
    %p107 = por %p105, %p106
    %p109 = scmp.ne.s32.totalorder %s92, %s108
    %p110 = scmp.eq.s32.totalorder %s20, 0
    %p111 = por %p109, %p110
    %s112 = ssub.s32 %s22, %s29
    %p113 = scmp.eq.s32.totalorder %s112, 0
    %s115 = sadd.s32 %s114, 1
    %s116 = scalar_select %p113, %s114, %s115
    %p119 = pneg %p113
    %p120 = scmp.eq.s32.totalorder %s14, 3
    %p121 = por %p119, %p120
    %p122 = scmp.ne.s32.totalorder %s114, %s117
    %p123 = scmp.eq.s32.totalorder %s14, 0
    %p124 = por %p122, %p123
    %p125 = scmp.ne.s32.totalorder %s114, %s117
    %p126 = scmp.eq.s32.totalorder %s19, 3
    %p127 = por %p125, %p126
    %p128 = scmp.ne.s32.totalorder %s117, %s118
    %p129 = scmp.eq.s32.totalorder %s19, 0
    %p130 = por %p128, %p129
    %p131 = scmp.ne.s32.totalorder %s117, %s118
    %p132 = scmp.eq.s32.totalorder %s20, 3
    %p133 = por %p131, %p132
    %p135 = scmp.ne.s32.totalorder %s118, %s134
    %p136 = scmp.eq.s32.totalorder %s20, 0
    %p137 = por %p135, %p136
    %s138 = ssub.s32 %s22, %s29
    %p139 = scmp.eq.s32.totalorder %s138, 0
    %s141 = sadd.s32 %s140, 1
    %s142 = scalar_select %p139, %s140, %s141
    %p145 = pneg %p139
    %p146 = scmp.eq.s32.totalorder %s14, 3
    %p147 = por %p145, %p146
    %p148 = scmp.ne.s32.totalorder %s140, %s143
    %p149 = scmp.eq.s32.totalorder %s14, 0
    %p150 = por %p148, %p149
    %p151 = scmp.ne.s32.totalorder %s140, %s143
    %p152 = scmp.eq.s32.totalorder %s19, 3
    %p153 = por %p151, %p152
    %p154 = scmp.ne.s32.totalorder %s143, %s144
    %p155 = scmp.eq.s32.totalorder %s19, 0
    %p156 = por %p154, %p155
    %p157 = scmp.ne.s32.totalorder %s143, %s144
    %p158 = scmp.eq.s32.totalorder %s20, 3
    %p159 = por %p157, %p158
    %p161 = scmp.ne.s32.totalorder %s144, %s160
    %p162 = scmp.eq.s32.totalorder %s20, 0
    %p163 = por %p161, %p162
    %s164 = ssub.s32 %s22, %s29
    %p165 = scmp.eq.s32.totalorder %s164, 0
    %s167 = sadd.s32 %s166, 1
    %s168 = scalar_select %p165, %s166, %s167
    %p171 = pneg %p165
    %p172 = scmp.eq.s32.totalorder %s14, 3
    %p173 = por %p171, %p172
    %p174 = scmp.ne.s32.totalorder %s166, %s169
    %p175 = scmp.eq.s32.totalorder %s14, 0
    %p176 = por %p174, %p175
    %p177 = scmp.ne.s32.totalorder %s166, %s169
    %p178 = scmp.eq.s32.totalorder %s19, 3
    %p179 = por %p177, %p178
    %p180 = scmp.ne.s32.totalorder %s169, %s170
    %p181 = scmp.eq.s32.totalorder %s19, 0
    %p182 = por %p180, %p181
    %p183 = scmp.ne.s32.totalorder %s169, %s170
    %p184 = scmp.eq.s32.totalorder %s20, 3
    %p185 = por %p183, %p184
    %p187 = scmp.ne.s32.totalorder %s170, %s186
    %p188 = scmp.eq.s32.totalorder %s20, 0
    %p189 = por %p187, %p188
    %s190 = ssub.s32 %s22, %s29
    %p191 = scmp.eq.s32.totalorder %s190, 0
    %s193 = sadd.s32 %s192, 1
    %s194 = scalar_select %p191, %s192, %s193
    %p197 = pneg %p191
    %p198 = scmp.eq.s32.totalorder %s14, 3
    %p199 = por %p197, %p198
    %p200 = scmp.ne.s32.totalorder %s192, %s195
    %p201 = scmp.eq.s32.totalorder %s14, 0
    %p202 = por %p200, %p201
    %p203 = scmp.ne.s32.totalorder %s192, %s195
    %p204 = scmp.eq.s32.totalorder %s19, 3
    %p205 = por %p203, %p204
    %p206 = scmp.ne.s32.totalorder %s195, %s196
    %p207 = scmp.eq.s32.totalorder %s19, 0
    %p208 = por %p206, %p207
    %p209 = scmp.ne.s32.totalorder %s195, %s196
    %p210 = scmp.eq.s32.totalorder %s20, 3
    %p211 = por %p209, %p210
    %p213 = scmp.ne.s32.totalorder %s196, %s212
    %p214 = scmp.eq.s32.totalorder %s20, 0
    %p215 = por %p213, %p214
    %s216 = ssub.s32 %s22, %s29
    %p217 = scmp.eq.s32.totalorder %s216, 0
    %s219 = sadd.s32 %s218, 1
    %s220 = scalar_select %p217, %s218, %s219
    %p223 = pneg %p217
    %p224 = scmp.eq.s32.totalorder %s14, 3
    %p225 = por %p223, %p224
    %p226 = scmp.ne.s32.totalorder %s218, %s221
    %p227 = scmp.eq.s32.totalorder %s14, 0
    %p228 = por %p226, %p227
    %p229 = scmp.ne.s32.totalorder %s218, %s221
    %p230 = scmp.eq.s32.totalorder %s19, 3
    %p231 = por %p229, %p230
    %p232 = scmp.ne.s32.totalorder %s221, %s222
    %p233 = scmp.eq.s32.totalorder %s19, 0
    %p234 = por %p232, %p233
    %p235 = scmp.ne.s32.totalorder %s221, %s222
    %p236 = scmp.eq.s32.totalorder %s20, 3
    %p237 = por %p235, %p236
    %p239 = scmp.ne.s32.totalorder %s222, %s238
    %p240 = scmp.eq.s32.totalorder %s20, 0
    %p241 = por %p239, %p240
    %s242 = ssub.s32 %s21, %s33
    %p243 = scmp.eq.s32.totalorder %s242, 0
    %s245 = sadd.s32 %s244, 1
    %s246 = scalar_select %p243, %s244, %s245
    %p249 = pneg %p243
    %p250 = scmp.eq.s32.totalorder %s14, 3
    %p251 = por %p249, %p250
    %p252 = scmp.ne.s32.totalorder %s244, %s247
    %p253 = scmp.eq.s32.totalorder %s14, 0
    %p254 = por %p252, %p253
    %p255 = scmp.ne.s32.totalorder %s244, %s247
    %p256 = scmp.eq.s32.totalorder %s19, 3
    %p257 = por %p255, %p256
    %p258 = scmp.ne.s32.totalorder %s247, %s248
    %p259 = scmp.eq.s32.totalorder %s19, 0
    %p260 = por %p258, %p259
    %p261 = scmp.ne.s32.totalorder %s247, %s248
    %p262 = scmp.eq.s32.totalorder %s20, 3
    %p263 = por %p261, %p262
    %p265 = scmp.ne.s32.totalorder %s248, %s264
    %p266 = scmp.eq.s32.totalorder %s20, 0
    %p267 = por %p265, %p266
    %p268 = scmp.le.s32.totalorder 1, %s14
    %p269 = scmp.lt.s32.totalorder %s14, 5
    %p270 = pnand %p268, %p269
    %p271 = pneg %p270
    // Predicated region
    $region9: #{vision_transformer_forward.4} parent=5 // pred_check
      _
    $region10: #{vision_transformer_forward.4} parent=5 // pred_check_branch
      %273 = sbr.rel (%p270) target = $region12
    $region11: #{vision_transformer_forward.4} parent=5 // pred_region
      %s274 = ssub.s32 %s14, 1
    $region12: #{vision_transformer_forward.4} parent=5 // pred_fallthru
      _
    %p275 = scmp.lt.s32.totalorder %s14, 4
    // Predicated region
    $region13: #{vision_transformer_forward.4} parent=5 // pred_check
      %p276 = pneg %p275
    $region14: #{vision_transformer_forward.4} parent=5 // pred_check_branch
      %278 = sbr.rel (%p276) target = $region16
    $region15: #{vision_transformer_forward.4} parent=5 // pred_region
      // Predicated region
      $region17: #{vision_transformer_forward.4} parent=15 // pred_check
        %p279 = pneg %p46
      $region18: #{vision_transformer_forward.4} parent=15 // pred_check_branch
        %281 = sbr.rel (%p279) target = $region20
      $region19: #{vision_transformer_forward.4} parent=15 // pred_region
        %p282 = scmp.lt.s32.totalorder %s21, 1
        %s283 = scalar_select %p282, %s21, 1
        %s284 = smul.addr %s283, 2
        %s285 = smul.addr %s284, 4
        %s286 = scalar_lea.vmem %s0, %s285
      $region20: #{vision_transformer_forward.4} parent=15 // pred_fallthru
        _
      // Predicated region
      $region21: #{vision_transformer_forward.4} parent=15 // pred_check
        %p287 = pneg %p72
      $region22: #{vision_transformer_forward.4} parent=15 // pred_check_branch
        %289 = sbr.rel (%p287) target = $region24
      $region23: #{vision_transformer_forward.4} parent=15 // pred_region
        %p290 = scmp.lt.s32.totalorder %s22, 1
        %s291 = scalar_select %p290, %s22, 1
        %s292 = smul.addr %s291, 8
        %s293 = scalar_lea.vmem %s1, %s292
      $region24: #{vision_transformer_forward.4} parent=15 // pred_fallthru
        _
      // Predicated region
      $region25: #{vision_transformer_forward.4} parent=15 // pred_check
        %p294 = pneg %p98
      $region26: #{vision_transformer_forward.4} parent=15 // pred_check_branch
        %296 = sbr.rel (%p294) target = $region28
      $region27: #{vision_transformer_forward.4} parent=15 // pred_region
        %p297 = scmp.lt.s32.totalorder %s22, 1
        %s298 = scalar_select %p297, %s22, 1
        %s299 = smul.addr %s298, 4
        %s300 = smul.addr %s299, 4
        %s301 = scalar_lea.vmem %s2, %s300
      $region28: #{vision_transformer_forward.4} parent=15 // pred_fallthru
        _
      // Predicated region
      $region29: #{vision_transformer_forward.4} parent=15 // pred_check
        %p302 = pneg %p124
      $region30: #{vision_transformer_forward.4} parent=15 // pred_check_branch
        %304 = sbr.rel (%p302) target = $region32
      $region31: #{vision_transformer_forward.4} parent=15 // pred_region
        %p305 = scmp.lt.s32.totalorder %s22, 1
        %s306 = scalar_select %p305, %s22, 1
        %s307 = scalar_lea.vmem %s3, %s306
      $region32: #{vision_transformer_forward.4} parent=15 // pred_fallthru
        _
      // Predicated region
      $region33: #{vision_transformer_forward.4} parent=15 // pred_check
        %p308 = pneg %p150
      $region34: #{vision_transformer_forward.4} parent=15 // pred_check_branch
        %310 = sbr.rel (%p308) target = $region36
      $region35: #{vision_transformer_forward.4} parent=15 // pred_region
        %p311 = scmp.lt.s32.totalorder %s22, 1
        %s312 = scalar_select %p311, %s22, 1
        %s313 = smul.addr %s312, 4
        %s314 = smul.addr %s313, 4
        %s315 = scalar_lea.vmem %s4, %s314
      $region36: #{vision_transformer_forward.4} parent=15 // pred_fallthru
        _
      // Predicated region
      $region37: #{vision_transformer_forward.4} parent=15 // pred_check
        %p316 = pneg %p176
      $region38: #{vision_transformer_forward.4} parent=15 // pred_check_branch
        %318 = sbr.rel (%p316) target = $region40
      $region39: #{vision_transformer_forward.4} parent=15 // pred_region
        %p319 = scmp.lt.s32.totalorder %s22, 1
        %s320 = scalar_select %p319, %s22, 1
        %s321 = smul.addr %s320, 4
        %s322 = smul.addr %s321, 4
        %s323 = scalar_lea.vmem %s5, %s322
      $region40: #{vision_transformer_forward.4} parent=15 // pred_fallthru
        _
      // Predicated region
      $region41: #{vision_transformer_forward.4} parent=15 // pred_check
        %p324 = pneg %p202
      $region42: #{vision_transformer_forward.4} parent=15 // pred_check_branch
        %326 = sbr.rel (%p324) target = $region44
      $region43: #{vision_transformer_forward.4} parent=15 // pred_region
        %p327 = scmp.lt.s32.totalorder %s22, 1
        %s328 = scalar_select %p327, %s22, 1
        %s329 = scalar_lea.vmem %s6, %s328
      $region44: #{vision_transformer_forward.4} parent=15 // pred_fallthru
        _
      // Predicated region
      $region45: #{vision_transformer_forward.4} parent=15 // pred_check
        %p330 = pneg %p228
      $region46: #{vision_transformer_forward.4} parent=15 // pred_check_branch
        %332 = sbr.rel (%p330) target = $region48
      $region47: #{vision_transformer_forward.4} parent=15 // pred_region
        %p333 = scmp.lt.s32.totalorder %s22, 1
        %s334 = scalar_select %p333, %s22, 1
        %s335 = smul.addr %s334, 16
        %s336 = smul.addr %s335, 4
        %s337 = scalar_lea.vmem %s7, %s336
      $region48: #{vision_transformer_forward.4} parent=15 // pred_fallthru
        _
    $region16: #{vision_transformer_forward.4} parent=5 // pred_fallthru
      _
    %p338 = scmp.le.s32.totalorder 1, %s14
    %p339 = scmp.lt.s32.totalorder %s14, 5
    %p340 = pnand %p338, %p339
    %p341 = pneg %p340
    // Predicated region
    $region49: #{vision_transformer_forward.4} parent=5 // pred_check
      _
    $region50: #{vision_transformer_forward.4} parent=5 // pred_check_branch
      %343 = sbr.rel (%p340) target = $region52
    $region51: #{vision_transformer_forward.4} parent=5 // pred_region
      %s344 = ssub.s32 %s14, 1
      %p345 = scmp.lt.s32.totalorder %s23, 1
      %s346 = scalar_select %p345, %s23, 1
      %s347 = smul.addr %s346, 2
      %s348 = smul.addr %s347, 4
      %s349 = scalar_lea.vmem %s0, %s348
      %p350 = pneg %p52
      %p351 = pneg %p49
      %p352 = scmp.lt.s32.totalorder %s24, 1
      %s353 = scalar_select %p352, %s24, 1
      %s354 = smul.addr %s353, 8
      %s355 = scalar_lea.vmem %s1, %s354
      %p356 = pneg %p78
      %p357 = pneg %p75
      %p358 = scmp.lt.s32.totalorder %s24, 1
      %s359 = scalar_select %p358, %s24, 1
      %s360 = smul.addr %s359, 4
      %s361 = smul.addr %s360, 4
      %s362 = scalar_lea.vmem %s2, %s361
      %p363 = pneg %p104
      %p364 = pneg %p101
      %p365 = scmp.lt.s32.totalorder %s24, 1
      %s366 = scalar_select %p365, %s24, 1
      %s367 = scalar_lea.vmem %s3, %s366
      %p368 = pneg %p130
      %p369 = pneg %p127
      %p370 = scmp.lt.s32.totalorder %s24, 1
      %s371 = scalar_select %p370, %s24, 1
      %s372 = smul.addr %s371, 4
      %s373 = smul.addr %s372, 4
      %s374 = scalar_lea.vmem %s4, %s373
      %p375 = pneg %p156
      %p376 = pneg %p153
      %p377 = scmp.lt.s32.totalorder %s24, 1
      %s378 = scalar_select %p377, %s24, 1
      %s379 = smul.addr %s378, 4
      %s380 = smul.addr %s379, 4
      %s381 = scalar_lea.vmem %s5, %s380
      %p382 = pneg %p182
      %p383 = pneg %p179
      %p384 = scmp.lt.s32.totalorder %s24, 1
      %s385 = scalar_select %p384, %s24, 1
      %s386 = scalar_lea.vmem %s6, %s385
      %p387 = pneg %p208
      %p388 = pneg %p205
      %p389 = scmp.lt.s32.totalorder %s24, 1
      %s390 = scalar_select %p389, %s24, 1
      %s391 = smul.addr %s390, 16
      %s392 = smul.addr %s391, 4
      %s393 = scalar_lea.vmem %s7, %s392
      %p394 = pneg %p234
      %p395 = pneg %p231
      %p396 = pneg %p260
      %p397 = pneg %p257
      %p398 = scmp.lt.s32.totalorder %s23, 1
      %s399 = scalar_select %p398, %s23, 1
      %s400 = smul.addr %s399, 2
      %s401 = smul.addr %s400, 4
      %s402 = scalar_lea.vmem %s8, %s401
      %p403 = scmp.lt.s32.totalorder %s23, 1
      %s404 = scalar_select %p403, %s23, 1
      %s405 = smul.addr %s404, 2
      %s406 = smul.addr %s405, 4
      %s407 = scalar_lea.vmem %s0, %s406
      %p408 = scmp.lt.s32.totalorder %s24, 1
      %s409 = scalar_select %p408, %s24, 1
      %s410 = smul.addr %s409, 8
      %s411 = scalar_lea.vmem %s1, %s410
      %p412 = scmp.lt.s32.totalorder %s24, 1
      %s413 = scalar_select %p412, %s24, 1
      %s414 = smul.addr %s413, 4
      %s415 = smul.addr %s414, 4
      %s416 = scalar_lea.vmem %s2, %s415
      %p417 = scmp.lt.s32.totalorder %s24, 1
      %s418 = scalar_select %p417, %s24, 1
      %s419 = scalar_lea.vmem %s3, %s418
      %p420 = scmp.lt.s32.totalorder %s24, 1
      %s421 = scalar_select %p420, %s24, 1
      %s422 = smul.addr %s421, 4
      %s423 = smul.addr %s422, 4
      %s424 = scalar_lea.vmem %s4, %s423
      %p425 = scmp.lt.s32.totalorder %s24, 1
      %s426 = scalar_select %p425, %s24, 1
      %s427 = smul.addr %s426, 4
      %s428 = smul.addr %s427, 4
      %s429 = scalar_lea.vmem %s5, %s428
      %p430 = scmp.lt.s32.totalorder %s24, 1
      %s431 = scalar_select %p430, %s24, 1
      %s432 = scalar_lea.vmem %s6, %s431
      %p433 = scmp.lt.s32.totalorder %s24, 1
      %s434 = scalar_select %p433, %s24, 1
      %s435 = smul.addr %s434, 16
      %s436 = smul.addr %s435, 4
      %s437 = scalar_lea.vmem %s7, %s436
      %p438 = scmp.lt.s32.totalorder %s23, 1
      %s439 = scalar_select %p438, %s23, 1
      %s440 = smul.addr %s439, 2
      %s441 = smul.addr %s440, 4
      %s442 = scalar_lea.vmem %s8, %s441
      %p444 = scmp.eq.s32.totalorder %s24, 0
      // Predicated region
      $region53: #{vision_transformer_forward.4} parent=51 // pred_check
        %p445 = pneg %p444
      $region54: #{vision_transformer_forward.4} parent=51 // pred_check_branch
        %447 = sbr.rel (%p445) target = $region56
      $region55: #{vision_transformer_forward.4} parent=51 // pred_region
        %v448 = vld [vmem:[%s407] sm:$0xf]
        %v449 = vld [vmem:[%s407 + $0x4] sm:$0xf]
        %v450 = vunpack.c.l.bf16 %v448
        %v451 = vunpack.c.l.bf16 %v449
        %vm452 = vcmask 261120
        %453 = vst.msk [vmem:[#allocation2] sm:$0xff] %vm452, %v450
        %454 = vst.msk [vmem:[#allocation2 + $0x8] sm:$0xff] %vm452, %v451
      $region56: #{vision_transformer_forward.4} parent=51 // pred_fallthru
        _
      %v455 = vld [vmem:[#allocation2] sm:$0xff]
      %v456 = vld [vmem:[#allocation2 + $0x8] sm:$0xff]
      %v457 = vld [vmem:[%s411] sm:$0xff]
      %vm458 = vcmask 261120
      %v459 = vsel %vm458, %v455, 0.0
      %460 = vadd.xlane.f32.xlu0 %v459
      %v461 = vpop.xlane.xlu0 %460
      %v462 = vsel %vm458, %v456, 0.0
      %463 = vadd.xlane.f32.xlu0 %v462
      %v464 = vpop.xlane.xlu0 %463
      %v465 = vrcp.pop 32.0
      %v466 = vmul.f32 32.0, %v465
      %v467 = vsub.f32 1.0, %v466
      %v468 = vmul.f32 %v465, %v467
      %v469 = vadd.f32 %v465, %v468
      %vm470 = vweird.f32 %v465
      %v471 = vsel %vm470, %v465, %v469
      %v472 = vmul.f32 %v461, %v471
      %v473 = vmul.f32 %v464, %v471
      %v474 = vsub.f32 %v455, %v472
      %v475 = vsub.f32 %v456, %v473
      %v476 = vmul.f32 %v474, %v474
      %v477 = vmul.f32 %v475, %v475
      %v478 = vsel %vm458, %v476, 0.0
      %479 = vadd.xlane.f32.xlu0 %v478
      %v480 = vpop.xlane.xlu0 %479
      %v481 = vsel %vm458, %v477, 0.0
      %482 = vadd.xlane.f32.xlu0 %v481
      %v483 = vpop.xlane.xlu0 %482
      %v484 = vmul.f32 %v480, %v471
      %v485 = vmul.f32 %v483, %v471
      %v486 = vadd.f32 %v484, 1e-05
      %v487 = vadd.f32 %v485, 1e-05
      %v488 = vrsqrt.pop %v486
      %v489 = vmul.f32 %v488, %v486
      %v490 = vmul.f32 %v489, %v488
      %v491 = vmul.f32 0.5, %v490
      %v492 = vsub.f32 1.5, %v491
      %v493 = vmul.f32 %v488, %v492
      %vm494 = vweird.f32 %v486
      %vm495 = vweird.f32 %v488
      %vm496 = vmor %vm494, %vm495
      %v497 = vsel %vm496, %v488, %v493
      %v498 = vrsqrt.pop %v487
      %v499 = vmul.f32 %v498, %v487
      %v500 = vmul.f32 %v499, %v498
      %v501 = vmul.f32 0.5, %v500
      %v502 = vsub.f32 1.5, %v501
      %v503 = vmul.f32 %v498, %v502
      %vm504 = vweird.f32 %v487
      %vm505 = vweird.f32 %v498
      %vm506 = vmor %vm504, %vm505
      %v507 = vsel %vm506, %v498, %v503
      %v508 = vmul.f32 %v474, %v497
      %v509 = vmul.f32 %v475, %v507
      %v510 = vperm.slane %v457, 0
      %v511 = vmul.f32 %v508, %v510
      %v512 = vmul.f32 %v509, %v510
      %v513 = vperm.slane %v457, 1
      %v514 = vadd.f32 %v511, %v513
      %v515 = vadd.f32 %v512, %v513
      %v516 = vpack.c.bf16 %v515, %v514
      %v517 = vld [vmem:[%s416] sm:$0xf]
      %v518 = vld [vmem:[%s416 + $0x4] sm:$0xf]
      %v519 = vld [vmem:[%s416 + $0x8] sm:$0xf]
      %v520 = vld [vmem:[%s416 + $0xc] sm:$0xf]
      %v521 = vld [vmem:[%s419] sm:$0x1]
      %v523 = vperm.slane %v521, 0
      %v529 = vunpack.c.l.b16 %v517
      %v530 = vunpack.c.l.b16 %v518
      %v531 = vunpack.c.l.b16 %v519
      %v532 = vunpack.c.l.b16 %v520
      %v533 = vpack.c.b16 %v530, %v529
      %v534 = vpack.c.b16 %v532, %v531
      %v538 = vsel %vm458, %v516, 0
      %540 = vmatpush.bf16.msra.mxu0 0
      %541 = vmatpush.bf16.msra.mxu0 0
      %542 = vmatpush.bf16.msra.mxu0 0
      %543 = vmatpush.bf16.msra.mxu0 0
      %544 = vmatpush.bf16.msra.mxu0 0
      %545 = vmatpush.bf16.msra.mxu0 0
      %546 = vmatpush.bf16.msra.mxu0 %v534
      %547 = vmatpush.bf16.msra.mxu0 %v533
      %548 = vmatmul.bf16.gmra.mxu0 %v538
      %v549 = vpop.f32.mrf.mxu0
      %v550 = vadd.f32 %v523, %v549
      %v551 = vpop.f32.mrf.mxu0
      %v552 = vadd.f32 %v523, %v551
      %553 = vdwg.mxu0
      %v554 = vpack.c.bf16 %v550, %v550
      %v555 = vpack.c.bf16 %v552, %v552
      %v556 = vlaneseq
      %v557 = vand.u32 %v556, 127
      %vm558 = vcmp.lt.s32.totalorder %v557, 5
      %v559 = vsel %vm558, 0.0, -1e+30
      %v562 = vunpack.c.l.b16 %v554
      %v563 = vunpack.c.l.b16 %v555
      %v564 = vpack.c.b16 %v563, %v562
      %565 = vrot.lane.b32.xlu0 %v564, 96
      %v566 = vpop.permute.xlu0 %565
      %vm567 = vcmask 64512
      %v569 = vsel %vm567, %v564, 0
      %v572 = vsel %vm567, %v566, 0
      %574 = vmatpush.bf16.xpose.msra.mxu0 0
      %575 = vmatpush.bf16.xpose.msra.mxu0 0
      %576 = vmatpush.bf16.xpose.msra.mxu0 0
      %577 = vmatpush.bf16.xpose.msra.mxu0 0
      %578 = vmatpush.bf16.xpose.msra.mxu0 0
      %579 = vmatpush.bf16.xpose.msra.mxu0 0
      %580 = vmatpush.bf16.xpose.msra.mxu0 0
      %581 = vmatpush.bf16.xpose.msra.mxu0 %v572
      %582 = vmatmul.bf16.gmra.mxu0 %v569
      %v583 = vpop.f32.mrf.mxu0
      %v584 = vadd.f32 %v559, %v583
      %v585 = vpop.f32.mrf.mxu0
      %v586 = vadd.f32 %v559, %v585
      %587 = vdwg.mxu0
      %vm588 = vcmask 130048
      %v589 = vsel %vm588, %v584, -inf
      %590 = vmax.xlane.f32.xlu0 %v589
      %v591 = vpop.xlane.xlu0 %590
      %v592 = vsel %vm588, %v586, -inf
      %593 = vmax.xlane.f32.xlu0 %v592
      %v594 = vpop.xlane.xlu0 %593
      %v595 = vsub.f32 %v584, %v591
      %v596 = vsub.f32 %v586, %v594
      %v597 = vmul.f32 %v595, 1.442695
      %v598 = vpow.pop %v597
      %v599 = vmul.f32 %v596, 1.442695
      %v600 = vpow.pop %v599
      %v601 = vsel %vm588, %v598, 0.0
      %602 = vadd.xlane.f32.xlu0 %v601
      %v603 = vpop.xlane.xlu0 %602
      %v604 = vsel %vm588, %v600, 0.0
      %605 = vadd.xlane.f32.xlu0 %v604
      %v606 = vpop.xlane.xlu0 %605
      %v607 = vrcp.pop %v603
      %v608 = vrcp.pop %v606
      %v609 = vmul.f32 %v598, %v607
      %v610 = vmul.f32 %v600, %v608
      %v611 = vpack.c.bf16 %v610, %v609
      %612 = vrot.lane.b32.xlu0 %v564, 64
      %v613 = vpop.permute.xlu0 %612
      %v616 = vsel %vm588, %v611, 0
      %618 = vmatpush.bf16.msra.mxu0 0
      %619 = vmatpush.bf16.msra.mxu0 0
      %620 = vmatpush.bf16.msra.mxu0 0
      %621 = vmatpush.bf16.msra.mxu0 0
      %622 = vmatpush.bf16.msra.mxu0 0
      %623 = vmatpush.bf16.msra.mxu0 0
      %624 = vmatpush.bf16.msra.mxu0 0
      %625 = vmatpush.bf16.msra.mxu0 %v613
      %626 = vmatmul.bf16.gmra.mxu0 %v616
      %v627 = vpop.f32.mrf.mxu0
      %v628 = vadd.f32 0.0, %v627
      %v629 = vpop.f32.mrf.mxu0
      %v630 = vadd.f32 0.0, %v629
      %631 = vdwg.mxu0
      %632 = vrot.lane.b32.xlu0 %v564, 120
      %v633 = vpop.permute.xlu0 %632
      %634 = vrot.lane.b32.xlu0 %v564, 88
      %v635 = vpop.permute.xlu0 %634
      %v637 = vsel %vm567, %v633, 0
      %v640 = vsel %vm567, %v635, 0
      %642 = vmatpush.bf16.xpose.msra.mxu0 0
      %643 = vmatpush.bf16.xpose.msra.mxu0 0
      %644 = vmatpush.bf16.xpose.msra.mxu0 0
      %645 = vmatpush.bf16.xpose.msra.mxu0 0
      %646 = vmatpush.bf16.xpose.msra.mxu0 0
      %647 = vmatpush.bf16.xpose.msra.mxu0 0
      %648 = vmatpush.bf16.xpose.msra.mxu0 0
      %649 = vmatpush.bf16.xpose.msra.mxu0 %v640
      %650 = vmatmul.bf16.gmra.mxu0 %v637
      %v651 = vpop.f32.mrf.mxu0
      %v652 = vadd.f32 %v559, %v651
      %v653 = vpop.f32.mrf.mxu0
      %v654 = vadd.f32 %v559, %v653
      %655 = vdwg.mxu0
      %v656 = vsel %vm588, %v652, -inf
      %657 = vmax.xlane.f32.xlu0 %v656
      %v658 = vpop.xlane.xlu0 %657
      %v659 = vsel %vm588, %v654, -inf
      %660 = vmax.xlane.f32.xlu0 %v659
      %v661 = vpop.xlane.xlu0 %660
      %v662 = vsub.f32 %v652, %v658
      %v663 = vsub.f32 %v654, %v661
      %v664 = vmul.f32 %v662, 1.442695
      %v665 = vpow.pop %v664
      %v666 = vmul.f32 %v663, 1.442695
      %v667 = vpow.pop %v666
      %v668 = vsel %vm588, %v665, 0.0
      %669 = vadd.xlane.f32.xlu0 %v668
      %v670 = vpop.xlane.xlu0 %669
      %v671 = vsel %vm588, %v667, 0.0
      %672 = vadd.xlane.f32.xlu0 %v671
      %v673 = vpop.xlane.xlu0 %672
      %v674 = vrcp.pop %v670
      %v675 = vrcp.pop %v673
      %v676 = vmul.f32 %v665, %v674
      %v677 = vmul.f32 %v667, %v675
      %v678 = vpack.c.bf16 %v677, %v676
      %679 = vrot.lane.b32.xlu0 %v564, 56
      %v680 = vpop.permute.xlu0 %679
      %v683 = vsel %vm588, %v678, 0
      %685 = vmatpush.bf16.msra.mxu0 0
      %686 = vmatpush.bf16.msra.mxu0 0
      %687 = vmatpush.bf16.msra.mxu0 0
      %688 = vmatpush.bf16.msra.mxu0 0
      %689 = vmatpush.bf16.msra.mxu0 0
      %690 = vmatpush.bf16.msra.mxu0 0
      %691 = vmatpush.bf16.msra.mxu0 0
      %692 = vmatpush.bf16.msra.mxu0 %v680
      %693 = vmatmul.bf16.gmra.mxu0 %v683
      %v694 = vpop.f32.mrf.mxu0
      %v695 = vadd.f32 0.0, %v694
      %v696 = vpop.f32.mrf.mxu0
      %v697 = vadd.f32 0.0, %v696
      %698 = vdwg.mxu0
      %699 = vrot.lane.b32.xlu0 %v564, 112
      %v700 = vpop.permute.xlu0 %699
      %701 = vrot.lane.b32.xlu0 %v564, 80
      %v702 = vpop.permute.xlu0 %701
      %v704 = vsel %vm567, %v700, 0
      %v707 = vsel %vm567, %v702, 0
      %709 = vmatpush.bf16.xpose.msra.mxu0 0
      %710 = vmatpush.bf16.xpose.msra.mxu0 0
      %711 = vmatpush.bf16.xpose.msra.mxu0 0
      %712 = vmatpush.bf16.xpose.msra.mxu0 0
      %713 = vmatpush.bf16.xpose.msra.mxu0 0
      %714 = vmatpush.bf16.xpose.msra.mxu0 0
      %715 = vmatpush.bf16.xpose.msra.mxu0 0
      %716 = vmatpush.bf16.xpose.msra.mxu0 %v707
      %717 = vmatmul.bf16.gmra.mxu0 %v704
      %v718 = vpop.f32.mrf.mxu0
      %v719 = vadd.f32 %v559, %v718
      %v720 = vpop.f32.mrf.mxu0
      %v721 = vadd.f32 %v559, %v720
      %722 = vdwg.mxu0
      %v723 = vsel %vm588, %v719, -inf
      %724 = vmax.xlane.f32.xlu0 %v723
      %v725 = vpop.xlane.xlu0 %724
      %v726 = vsel %vm588, %v721, -inf
      %727 = vmax.xlane.f32.xlu0 %v726
      %v728 = vpop.xlane.xlu0 %727
      %v729 = vsub.f32 %v719, %v725
      %v730 = vsub.f32 %v721, %v728
      %v731 = vmul.f32 %v729, 1.442695
      %v732 = vpow.pop %v731
      %v733 = vmul.f32 %v730, 1.442695
      %v734 = vpow.pop %v733
      %v735 = vsel %vm588, %v732, 0.0
      %736 = vadd.xlane.f32.xlu0 %v735
      %v737 = vpop.xlane.xlu0 %736
      %v738 = vsel %vm588, %v734, 0.0
      %739 = vadd.xlane.f32.xlu0 %v738
      %v740 = vpop.xlane.xlu0 %739
      %v741 = vrcp.pop %v737
      %v742 = vrcp.pop %v740
      %v743 = vmul.f32 %v732, %v741
      %v744 = vmul.f32 %v734, %v742
      %v745 = vpack.c.bf16 %v744, %v743
      %746 = vrot.lane.b32.xlu0 %v564, 48
      %v747 = vpop.permute.xlu0 %746
      %v750 = vsel %vm588, %v745, 0
      %752 = vmatpush.bf16.msra.mxu0 0
      %753 = vmatpush.bf16.msra.mxu0 0
      %754 = vmatpush.bf16.msra.mxu0 0
      %755 = vmatpush.bf16.msra.mxu0 0
      %756 = vmatpush.bf16.msra.mxu0 0
      %757 = vmatpush.bf16.msra.mxu0 0
      %758 = vmatpush.bf16.msra.mxu0 0
      %759 = vmatpush.bf16.msra.mxu0 %v747
      %760 = vmatmul.bf16.gmra.mxu0 %v750
      %v761 = vpop.f32.mrf.mxu0
      %v762 = vadd.f32 0.0, %v761
      %v763 = vpop.f32.mrf.mxu0
      %v764 = vadd.f32 0.0, %v763
      %765 = vdwg.mxu0
      %766 = vrot.lane.b32.xlu0 %v564, 104
      %v767 = vpop.permute.xlu0 %766
      %768 = vrot.lane.b32.xlu0 %v564, 72
      %v769 = vpop.permute.xlu0 %768
      %v771 = vsel %vm567, %v767, 0
      %v774 = vsel %vm567, %v769, 0
      %776 = vmatpush.bf16.xpose.msra.mxu0 0
      %777 = vmatpush.bf16.xpose.msra.mxu0 0
      %778 = vmatpush.bf16.xpose.msra.mxu0 0
      %779 = vmatpush.bf16.xpose.msra.mxu0 0
      %780 = vmatpush.bf16.xpose.msra.mxu0 0
      %781 = vmatpush.bf16.xpose.msra.mxu0 0
      %782 = vmatpush.bf16.xpose.msra.mxu0 0
      %783 = vmatpush.bf16.xpose.msra.mxu0 %v774
      %784 = vmatmul.bf16.gmra.mxu0 %v771
      %v785 = vpop.f32.mrf.mxu0
      %v786 = vadd.f32 %v559, %v785
      %v787 = vpop.f32.mrf.mxu0
      %v788 = vadd.f32 %v559, %v787
      %789 = vdwg.mxu0
      %v790 = vsel %vm588, %v786, -inf
      %791 = vmax.xlane.f32.xlu0 %v790
      %v792 = vpop.xlane.xlu0 %791
      %v793 = vsel %vm588, %v788, -inf
      %794 = vmax.xlane.f32.xlu0 %v793
      %v795 = vpop.xlane.xlu0 %794
      %v796 = vsub.f32 %v786, %v792
      %v797 = vsub.f32 %v788, %v795
      %v798 = vmul.f32 %v796, 1.442695
      %v799 = vpow.pop %v798
      %v800 = vmul.f32 %v797, 1.442695
      %v801 = vpow.pop %v800
      %v802 = vsel %vm588, %v799, 0.0
      %803 = vadd.xlane.f32.xlu0 %v802
      %v804 = vpop.xlane.xlu0 %803
      %v805 = vsel %vm588, %v801, 0.0
      %806 = vadd.xlane.f32.xlu0 %v805
      %v807 = vpop.xlane.xlu0 %806
      %v808 = vrcp.pop %v804
      %v809 = vrcp.pop %v807
      %v810 = vmul.f32 %v799, %v808
      %v811 = vmul.f32 %v801, %v809
      %v812 = vpack.c.bf16 %v811, %v810
      %813 = vrot.lane.b32.xlu0 %v564, 40
      %v814 = vpop.permute.xlu0 %813
      %v817 = vsel %vm588, %v812, 0
      %819 = vmatpush.bf16.msra.mxu0 0
      %820 = vmatpush.bf16.msra.mxu0 0
      %821 = vmatpush.bf16.msra.mxu0 0
      %822 = vmatpush.bf16.msra.mxu0 0
      %823 = vmatpush.bf16.msra.mxu0 0
      %824 = vmatpush.bf16.msra.mxu0 0
      %825 = vmatpush.bf16.msra.mxu0 0
      %826 = vmatpush.bf16.msra.mxu0 %v814
      %827 = vmatmul.bf16.gmra.mxu0 %v817
      %v828 = vpop.f32.mrf.mxu0
      %v829 = vadd.f32 0.0, %v828
      %v830 = vpop.f32.mrf.mxu0
      %v831 = vadd.f32 0.0, %v830
      %832 = vdwg.mxu0
      %835 = vrot.lane.b32.xlu0 %v695, 8
      %v836 = vpop.permute.xlu0 %835
      %837 = vrot.lane.b32.xlu0 %v697, 8
      %v838 = vpop.permute.xlu0 %837
      %843 = vrot.lane.b32.xlu0 %v762, 16
      %v844 = vpop.permute.xlu0 %843
      %845 = vrot.lane.b32.xlu0 %v764, 16
      %v846 = vpop.permute.xlu0 %845
      %851 = vrot.lane.b32.xlu0 %v829, 24
      %v852 = vpop.permute.xlu0 %851
      %853 = vrot.lane.b32.xlu0 %v831, 24
      %v854 = vpop.permute.xlu0 %853
      %v857 = vsel %vm567, %v628, %v836
      %v858 = vsel %vm567, %v630, %v838
      %v859 = vsel %vm588, %v857, %v844
      %v860 = vsel %vm588, %v858, %v846
      %vm861 = vcmask 195584
      %v862 = vsel %vm861, %v859, %v852
      %v863 = vsel %vm861, %v860, %v854
      %v864 = vpack.c.bf16 %v863, %v862
      %v865 = vld [vmem:[%s424] sm:$0xf]
      %v866 = vld [vmem:[%s424 + $0x4] sm:$0xf]
      %v867 = vld [vmem:[%s424 + $0x8] sm:$0xf]
      %v868 = vld [vmem:[%s424 + $0xc] sm:$0xf]
      %v869 = vperm.slane %v457, 2
      %v874 = vunpack.c.l.b16 %v865
      %v875 = vunpack.c.l.b16 %v866
      %v876 = vunpack.c.l.b16 %v867
      %v877 = vunpack.c.l.b16 %v868
      %v878 = vpack.c.b16 %v875, %v874
      %v879 = vpack.c.b16 %v877, %v876
      %v883 = vsel %vm458, %v864, 0
      %885 = vmatpush.bf16.msra.mxu0 0
      %886 = vmatpush.bf16.msra.mxu0 0
      %887 = vmatpush.bf16.msra.mxu0 0
      %888 = vmatpush.bf16.msra.mxu0 0
      %889 = vmatpush.bf16.msra.mxu0 0
      %890 = vmatpush.bf16.msra.mxu0 0
      %891 = vmatpush.bf16.msra.mxu0 %v879
      %892 = vmatpush.bf16.msra.mxu0 %v878
      %893 = vmatmul.bf16.gmra.mxu0 %v883
      %v894 = vpop.f32.mrf.mxu0
      %v895 = vadd.f32 %v869, %v894
      %v896 = vpop.f32.mrf.mxu0
      %v897 = vadd.f32 %v869, %v896
      %898 = vdwg.mxu0
      %v899 = vadd.f32 %v455, %v895
      %v900 = vadd.f32 %v456, %v897
      %v901 = vsel %vm458, %v899, 0.0
      %902 = vadd.xlane.f32.xlu0 %v901
      %v903 = vpop.xlane.xlu0 %902
      %v904 = vsel %vm458, %v900, 0.0
      %905 = vadd.xlane.f32.xlu0 %v904
      %v906 = vpop.xlane.xlu0 %905
      %v907 = vmul.f32 %v903, %v471
      %v908 = vmul.f32 %v906, %v471
      %v909 = vsub.f32 %v899, %v907
      %v910 = vsub.f32 %v900, %v908
      %v911 = vmul.f32 %v909, %v909
      %v912 = vmul.f32 %v910, %v910
      %v913 = vsel %vm458, %v911, 0.0
      %914 = vadd.xlane.f32.xlu0 %v913
      %v915 = vpop.xlane.xlu0 %914
      %v916 = vsel %vm458, %v912, 0.0
      %917 = vadd.xlane.f32.xlu0 %v916
      %v918 = vpop.xlane.xlu0 %917
      %v919 = vmul.f32 %v915, %v471
      %v920 = vmul.f32 %v918, %v471
      %v921 = vadd.f32 %v919, 1e-05
      %v922 = vadd.f32 %v920, 1e-05
      %v923 = vrsqrt.pop %v921
      %v924 = vmul.f32 %v923, %v921
      %v925 = vmul.f32 %v924, %v923
      %v926 = vmul.f32 0.5, %v925
      %v927 = vsub.f32 1.5, %v926
      %v928 = vmul.f32 %v923, %v927
      %vm929 = vweird.f32 %v921
      %vm930 = vweird.f32 %v923
      %vm931 = vmor %vm929, %vm930
      %v932 = vsel %vm931, %v923, %v928
      %v933 = vrsqrt.pop %v922
      %v934 = vmul.f32 %v933, %v922
      %v935 = vmul.f32 %v934, %v933
      %v936 = vmul.f32 0.5, %v935
      %v937 = vsub.f32 1.5, %v936
      %v938 = vmul.f32 %v933, %v937
      %vm939 = vweird.f32 %v922
      %vm940 = vweird.f32 %v933
      %vm941 = vmor %vm939, %vm940
      %v942 = vsel %vm941, %v933, %v938
      %v943 = vmul.f32 %v909, %v932
      %v944 = vmul.f32 %v910, %v942
      %v945 = vperm.slane %v457, 3
      %v946 = vmul.f32 %v943, %v945
      %v947 = vmul.f32 %v944, %v945
      %v948 = vperm.slane %v457, 4
      %v949 = vadd.f32 %v946, %v948
      %v950 = vadd.f32 %v947, %v948
      %v951 = vpack.c.bf16 %v950, %v949
      %v952 = vld [vmem:[%s429] sm:$0xf]
      %v953 = vld [vmem:[%s429 + $0x4] sm:$0xf]
      %v954 = vld [vmem:[%s429 + $0x8] sm:$0xf]
      %v955 = vld [vmem:[%s429 + $0xc] sm:$0xf]
      %v956 = vld [vmem:[%s432] sm:$0x1]
      %v958 = vperm.slane %v956, 0
      %v964 = vunpack.c.l.b16 %v952
      %v965 = vunpack.c.l.b16 %v953
      %v966 = vunpack.c.l.b16 %v954
      %v967 = vunpack.c.l.b16 %v955
      %v968 = vpack.c.b16 %v965, %v964
      %v969 = vpack.c.b16 %v967, %v966
      %v973 = vsel %vm458, %v951, 0
      %975 = vmatpush.bf16.msra.mxu0 0
      %976 = vmatpush.bf16.msra.mxu0 0
      %977 = vmatpush.bf16.msra.mxu0 0
      %978 = vmatpush.bf16.msra.mxu0 0
      %979 = vmatpush.bf16.msra.mxu0 0
      %980 = vmatpush.bf16.msra.mxu0 0
      %981 = vmatpush.bf16.msra.mxu0 %v969
      %982 = vmatpush.bf16.msra.mxu0 %v968
      %983 = vmatmul.bf16.gmra.mxu0 %v973
      %v984 = vpop.f32.mrf.mxu0
      %v985 = vadd.f32 %v958, %v984
      %v986 = vpop.f32.mrf.mxu0
      %v987 = vadd.f32 %v958, %v986
      %988 = vdwg.mxu0
      %v989 = vmul.f32 %v985, 1.702
      %v990 = vmul.f32 %v987, 1.702
      %v991 = vxor.u32 %v989, 2147483648
      %v992 = vxor.u32 %v990, 2147483648
      %v993 = vmul.f32 %v991, 1.442695
      %v994 = vpow.pop %v993
      %v995 = vmul.f32 %v992, 1.442695
      %v996 = vpow.pop %v995
      %v997 = vadd.f32 %v994, 1.0
      %v998 = vadd.f32 %v996, 1.0
      %v999 = vrcp.pop %v997
      %v1000 = vmul.f32 %v997, %v999
      %v1001 = vsub.f32 1.0, %v1000
      %v1002 = vmul.f32 %v999, %v1001
      %v1003 = vadd.f32 %v999, %v1002
      %vm1004 = vweird.f32 %v997
      %vm1005 = vweird.f32 %v999
      %vm1006 = vmor %vm1004, %vm1005
      %v1007 = vsel %vm1006, %v999, %v1003
      %v1008 = vand.u32 2147483647, %v997
      %vm1009 = vcmp.eq.f32.partialorder %v1008, 8.507059e+37
      %v1010 = vand.u32 %v997, 2147483648
      %v1011 = vor.u32 1.1754944e-38, %v1010
      %v1012 = vsel %vm1009, %v1011, %v1007
      %v1013 = vmul.f32 1.0, %v1012
      %v1014 = vrcp.pop %v998
      %v1015 = vmul.f32 %v998, %v1014
      %v1016 = vsub.f32 1.0, %v1015
      %v1017 = vmul.f32 %v1014, %v1016
      %v1018 = vadd.f32 %v1014, %v1017
      %vm1019 = vweird.f32 %v998
      %vm1020 = vweird.f32 %v1014
      %vm1021 = vmor %vm1019, %vm1020
      %v1022 = vsel %vm1021, %v1014, %v1018
      %v1023 = vand.u32 2147483647, %v998
      %vm1024 = vcmp.eq.f32.partialorder %v1023, 8.507059e+37
      %v1025 = vand.u32 %v998, 2147483648
      %v1026 = vor.u32 1.1754944e-38, %v1025
      %v1027 = vsel %vm1024, %v1026, %v1022
      %v1028 = vmul.f32 1.0, %v1027
      %v1029 = vmul.f32 %v985, %v1013
      %v1030 = vmul.f32 %v987, %v1028
      %v1031 = vpack.c.bf16 %v1030, %v1029
      %v1032 = vld [vmem:[%s437] sm:$0xf]
      %v1033 = vld [vmem:[%s437 + $0x4] sm:$0xf]
      %v1034 = vld [vmem:[%s437 + $0x8] sm:$0xf]
      %v1035 = vld [vmem:[%s437 + $0xc] sm:$0xf]
      %v1036 = vld [vmem:[%s437 + $0x10] sm:$0xf]
      %v1037 = vld [vmem:[%s437 + $0x14] sm:$0xf]
      %v1038 = vld [vmem:[%s437 + $0x18] sm:$0xf]
      %v1039 = vld [vmem:[%s437 + $0x1c] sm:$0xf]
      %v1040 = vld [vmem:[%s437 + $0x20] sm:$0xf]
      %v1041 = vld [vmem:[%s437 + $0x24] sm:$0xf]
      %v1042 = vld [vmem:[%s437 + $0x28] sm:$0xf]
      %v1043 = vld [vmem:[%s437 + $0x2c] sm:$0xf]
      %v1044 = vld [vmem:[%s437 + $0x30] sm:$0xf]
      %v1045 = vld [vmem:[%s437 + $0x34] sm:$0xf]
      %v1046 = vld [vmem:[%s437 + $0x38] sm:$0xf]
      %v1047 = vld [vmem:[%s437 + $0x3c] sm:$0xf]
      %v1048 = vperm.slane %v457, 5
      %v1065 = vunpack.c.l.b16 %v1032
      %v1066 = vunpack.c.l.b16 %v1033
      %v1067 = vunpack.c.l.b16 %v1034
      %v1068 = vunpack.c.l.b16 %v1035
      %v1069 = vunpack.c.l.b16 %v1036
      %v1070 = vunpack.c.l.b16 %v1037
      %v1071 = vunpack.c.l.b16 %v1038
      %v1072 = vunpack.c.l.b16 %v1039
      %v1073 = vunpack.c.l.b16 %v1040
      %v1074 = vunpack.c.l.b16 %v1041
      %v1075 = vunpack.c.l.b16 %v1042
      %v1076 = vunpack.c.l.b16 %v1043
      %v1077 = vunpack.c.l.b16 %v1044
      %v1078 = vunpack.c.l.b16 %v1045
      %v1079 = vunpack.c.l.b16 %v1046
      %v1080 = vunpack.c.l.b16 %v1047
      %v1081 = vpack.c.b16 %v1066, %v1065
      %v1082 = vpack.c.b16 %v1068, %v1067
      %v1083 = vpack.c.b16 %v1070, %v1069
      %v1084 = vpack.c.b16 %v1072, %v1071
      %v1085 = vpack.c.b16 %v1074, %v1073
      %v1086 = vpack.c.b16 %v1076, %v1075
      %v1087 = vpack.c.b16 %v1078, %v1077
      %v1088 = vpack.c.b16 %v1080, %v1079
      %1097 = vmatpush.bf16.msra.mxu0 %v1088
      %1098 = vmatpush.bf16.msra.mxu0 %v1087
      %1099 = vmatpush.bf16.msra.mxu0 %v1086
      %1100 = vmatpush.bf16.msra.mxu0 %v1085
      %1101 = vmatpush.bf16.msra.mxu0 %v1084
      %1102 = vmatpush.bf16.msra.mxu0 %v1083
      %1103 = vmatpush.bf16.msra.mxu0 %v1082
      %1104 = vmatpush.bf16.msra.mxu0 %v1081
      %1105 = vmatmul.bf16.gmra.mxu0 %v1031
      %v1106 = vpop.f32.mrf.mxu0
      %v1107 = vadd.f32 %v1048, %v1106
      %v1108 = vpop.f32.mrf.mxu0
      %v1109 = vadd.f32 %v1048, %v1108
      %1110 = vdwg.mxu0
      %v1111 = vadd.f32 %v899, %v1107
      %v1112 = vadd.f32 %v900, %v1109
      %1113 = vst.msk [vmem:[#allocation2] sm:$0xff] %vm458, %v1111
      %1114 = vst.msk [vmem:[#allocation2 + $0x8] sm:$0xff] %vm458, %v1112
      %p1115 = scmp.eq.s32.totalorder %s24, 1
      // Predicated region
      $region57: #{vision_transformer_forward.4} parent=51 // pred_check
        %p1116 = pneg %p1115
      $region58: #{vision_transformer_forward.4} parent=51 // pred_check_branch
        %1118 = sbr.rel (%p1116) target = $region60
      $region59: #{vision_transformer_forward.4} parent=51 // pred_region
        %v1119 = vpack.c.bf16 %v1111, %v1111
        %v1120 = vpack.c.bf16 %v1112, %v1112
        %vm1121 = vcmask 257024
        %1122 = vst.msk [vmem:[%s442] sm:$0xf] %vm1121, %v1119
        %1123 = vst.msk [vmem:[%s442 + $0x4] sm:$0xf] %vm1121, %v1120
      $region60: #{vision_transformer_forward.4} parent=51 // pred_fallthru
        _
      %p1124 = scmp.lt.s32.totalorder %s23, 1
      %s1125 = scalar_select %p1124, %s23, 1
      %s1126 = smul.addr %s1125, 2
      %s1127 = smul.addr %s1126, 4
      %s1128 = scalar_lea.vmem %s8, %s1127
      // Predicated region
      $region61: #{vision_transformer_forward.4} parent=51 // pred_check
        %p1129 = pneg %p257
      $region62: #{vision_transformer_forward.4} parent=51 // pred_check_branch
        %1131 = sbr.rel (%p1129) target = $region64
      $region63: #{vision_transformer_forward.4} parent=51 // pred_region
        _
      $region64: #{vision_transformer_forward.4} parent=51 // pred_fallthru
        _
    $region52: #{vision_transformer_forward.4} parent=5 // pred_fallthru
      _
    %p1132 = scmp.le.s32.totalorder 2, %s14
    // Predicated region
    $region65: #{vision_transformer_forward.4} parent=5 // pred_check
      %p1133 = pneg %p1132
    $region66: #{vision_transformer_forward.4} parent=5 // pred_check_branch
      %1135 = sbr.rel (%p1133) target = $region68
    $region67: #{vision_transformer_forward.4} parent=5 // pred_region
      %s1136 = ssub.s32 %s14, 2
      // Predicated region
      $region69: #{vision_transformer_forward.4} parent=67 // pred_check
        %p1137 = pneg %p263
      $region70: #{vision_transformer_forward.4} parent=67 // pred_check_branch
        %1139 = sbr.rel (%p1137) target = $region72
      $region71: #{vision_transformer_forward.4} parent=67 // pred_region
        %p1140 = scmp.lt.s32.totalorder %s25, 1
        %s1141 = scalar_select %p1140, %s25, 1
        %s1142 = smul.addr %s1141, 2
        %s1143 = smul.addr %s1142, 4
        %s1144 = scalar_lea.vmem %s8, %s1143
      $region72: #{vision_transformer_forward.4} parent=67 // pred_fallthru
        _
    $region68: #{vision_transformer_forward.4} parent=5 // pred_fallthru
      _
  $region6: #{vision_transformer_forward.4} parent=0 // loop_footer
    %s18 = sadd.s32 1, %s14
  $region7: #{vision_transformer_forward.4} parent=0 // loop_footer_branch
    %13 = sbr.rel target = $region3
  $region8: #{vision_transformer_forward.4} parent=0 // loop_exit
    _

</llo_original>
